<compile_context>
chip_gen: v5e
topology: v5e:2x2
jax: 0.10.0
libtpu: 0.0.40
codegen_flags: <defaults>
</compile_context>

<pallas_src>
import math
from itertools import product

import numpy as np
import jax
import jax.numpy as jnp
from jax import lax
from jax.experimental import pallas as pl
from jax.experimental.pallas import tpu as pltpu

# ---------------- synthetic cfg ----------------
NUM_CLASSES   = 8
MASK_DIM      = 8
ASPECT_RATIOS = [[1, 0.5, 2]]
SCALES        = [8.0]
MAX_SIZE      = 64
NUM_PRIORS    = sum(len(a) * len(SCALES) for a in ASPECT_RATIOS)   # = 3

C_BBOX = NUM_PRIORS * 4             # 12
C_CONF = NUM_PRIORS * NUM_CLASSES   # 24
C_MASK = NUM_PRIORS * MASK_DIM      # 24
C_HEAD = C_BBOX + C_CONF + C_MASK   # 60
C_HEAD_PAD = 128                    # fused head output padded to a lane-dense 128

# 3x3 tap order (dy outer, dx inner) == row-major (ky, kx) of an HWIO kernel.
_TAPS = tuple((dy, dx) for dy in (-1, 0, 1) for dx in (-1, 0, 1))


# ---------------- Pallas kernel ----------------
def _make_kernel(H, W, C_IN, C_OUT):
    """Fused upfeature (3x3 conv + ReLU) + fused bbox|conf|mask 3x3 head conv.

    Operates on one image strip of shape (H*W, C) per grid step (grid axis = batch).
    """
    assert (H & (H - 1)) == 0 and (W & (W - 1)) == 0, "power-of-two H, W assumed"
    # TODO(synk): non-power-of-two H/W need host-precomputed coordinate planes
    # instead of the `& (W-1)` index math below.
    HW = H * W
    assert HW % 8 == 0

    def kernel(x_ref,                  # (HW, C_IN)            bf16
               wup_ref, bup_ref,       # (9, C_IN, C_OUT) bf16, (1, C_OUT) f32
               whd_ref, bhd_ref,       # (9, C_OUT, 128)  bf16, (1, 128)   f32
               mcol_ref,               # (1, 128) f32: 1.0 on mask-coeff columns
               out_ref):               # (HW, 128)             f32
        # ---- hoisted position / boundary masks: computed ONCE, shared by both convs,
        # ---- kept as (HW, 1) column vectors that broadcast across lanes.
        p = lax.broadcasted_iota(jnp.int32, (HW, 1), 0)   # flat position in the image
        xc = p & (W - 1)                                  # column inside the row
        valid = []
        for dy, dx in _TAPS:
            conds = []
            if dy < 0:
                conds.append(p >= -dy * W)        # y + dy >= 0
            elif dy > 0:
                conds.append(p < HW - dy * W)     # y + dy <  H
            if dx < 0:
                conds.append(xc >= -dx)           # x + dx >= 0
            elif dx > 0:
                conds.append(xc < W - dx)         # x + dx <  W
            if conds:
                v = conds[0]
                for c in conds[1:]:
                    v = v & c
                valid.append(v.astype(jnp.float32))       # (HW, 1) 0/1 multiplier
            else:
                valid.append(None)                        # center tap: always valid

        def conv3x3(v_f32, w_ref, b_ref):
            """3x3 / pad=1 conv == 9 per-tap accumulating matmuls (f32 accumulation).

            Spatial shifts are circular sublane rolls (XLU); the (HW,1) masks implement
            the conv zero padding (wrapped rows always land on masked positions).
            """
            acc = None
            for k, (dy, dx) in enumerate(_TAPS):
                off = dy * W + dx
                t = v_f32 if off == 0 else pltpu.roll(v_f32, (-off) % HW, axis=0)
                if valid[k] is not None:
                    t = t * valid[k]                       # broadcast across lanes
                part = jnp.dot(t.astype(jnp.bfloat16), w_ref[k],
                               preferred_element_type=jnp.float32)
                acc = part if acc is None else acc + part
            return acc + b_ref[...]

        # upfeature: 3x3 conv + ReLU
        xf = x_ref[...].astype(jnp.float32)
        h = jnp.maximum(conv3x3(xf, wup_ref, bup_ref), 0.0)

        # fused bbox|conf|mask head conv
        o = conv3x3(h, whd_ref, bhd_ref)

        # lincomb coeff activation: tanh blended onto the mask columns only
        # (tanh over all 128 lanes rides the otherwise-idle EUP slot).
        m = mcol_ref[...]
        out_ref[...] = o + m * (jnp.tanh(o) - o)

    return kernel


# ---------------- one-time parameter layout prep (host-side) ----------------
def prepare_params(params):
    """Fuse / pad / bf16-cast weights once at load time (not per forward call)."""
    c_in = params['w_up'].shape[2]
    c_out = params['w_up'].shape[3]

    w_up = params['w_up'].reshape(9, c_in, c_out).astype(jnp.bfloat16)      # per-tap blocks
    b_up = params['b_up'].astype(jnp.float32)

    w_hd = jnp.concatenate(
        [params['w_bbox'], params['w_conf'], params['w_mask']], axis=-1)    # (3,3,C_OUT,60)
    w_hd = jnp.pad(w_hd, ((0, 0), (0, 0), (0, 0), (0, C_HEAD_PAD - C_HEAD)))
    w_hd = w_hd.reshape(9, c_out, C_HEAD_PAD).astype(jnp.bfloat16)
    b_hd = jnp.concatenate(
        [params['b_bbox'], params['b_conf'], params['b_mask']], axis=-1)    # (1,60)
    b_hd = jnp.pad(b_hd, ((0, 0), (0, C_HEAD_PAD - C_HEAD))).astype(jnp.float32)

    mcol = np.zeros((1, C_HEAD_PAD), np.float32)
    mcol[0, C_BBOX + C_CONF:C_HEAD] = 1.0                                   # tanh columns

    return {'w_up': w_up, 'b_up': b_up, 'w_hd': w_hd, 'b_hd': b_hd,
            'mask_cols': jnp.asarray(mcol)}


# ---------------- wrapper ----------------
def prediction_module_forward(x_nchw, prep):
    B, C_IN, H, W = x_nchw.shape
    C_OUT = prep['w_up'].shape[-1]
    HW = H * W
    M = B * HW

    # NCHW -> NHWC -> (B*H*W, C_IN); bf16 on the wire halves the input DMA bytes.
    x2d = jnp.transpose(x_nchw, (0, 2, 3, 1)).reshape(M, C_IN).astype(jnp.bfloat16)

    out = pl.pallas_call(
        _make_kernel(H, W, C_IN, C_OUT),
        out_shape=jax.ShapeDtypeStruct((M, C_HEAD_PAD), jnp.float32),
        grid=(B,),                                                   # one image per step
        in_specs=[
            pl.BlockSpec((HW, C_IN), lambda b: (b, 0)),              # image strip
            pl.BlockSpec((9, C_IN, C_OUT), lambda b: (0, 0, 0)),     # weights: resident
            pl.BlockSpec((1, C_OUT), lambda b: (0, 0)),
            pl.BlockSpec((9, C_OUT, C_HEAD_PAD), lambda b: (0, 0, 0)),
            pl.BlockSpec((1, C_HEAD_PAD), lambda b: (0, 0)),
            pl.BlockSpec((1, C_HEAD_PAD), lambda b: (0, 0)),
        ],
        out_specs=pl.BlockSpec((HW, C_HEAD_PAD), lambda b: (b, 0)),
        compiler_params=pltpu.CompilerParams(
            dimension_semantics=("parallel",),          # shard batch across TCs (v7x)
            vmem_limit_bytes=32 * 1024 * 1024),
    )(x2d, prep['w_up'], prep['b_up'], prep['w_hd'], prep['b_hd'], prep['mask_cols'])

    out = out.reshape(B, HW, C_HEAD_PAD)
    loc  = out[..., :C_BBOX].reshape(B, HW * NUM_PRIORS, 4)
    conf = out[..., C_BBOX:C_BBOX + C_CONF].reshape(B, HW * NUM_PRIORS, NUM_CLASSES)
    mask = out[..., C_BBOX + C_CONF:C_HEAD].reshape(B, HW * NUM_PRIORS, MASK_DIM)
    priors = make_priors(H, W)
    return {'loc': loc, 'conf': conf, 'mask': mask, 'priors': priors}


# ---------------- priors (host-side scalar loop, as in make_priors) ----------------
def make_priors(conv_h, conv_w):
    data = []
    for j, i in product(range(conv_h), range(conv_w)):
        x = (i + 0.5) / conv_w
        y = (j + 0.5) / conv_h
        for ars in ASPECT_RATIOS:
            for scale in SCALES:
                for ar in ars:
                    ar = math.sqrt(ar)            # cfg.backbone.preapply_sqrt = False
                    w = scale * ar / MAX_SIZE     # cfg.backbone.use_pixel_scales = True
                    h = scale / ar / MAX_SIZE
                    h = w                         # cfg.backbone.use_square_anchors = True
                    data += [x, y, w, h]
    return jnp.asarray(np.asarray(data, dtype=np.float32).reshape(-1, 4))


# ---------------- deterministic parameter init ----------------
def init_params(key, c_in, c_out):
    ks = jax.random.split(key, 8)
    conv_w = lambda k, ci, co: jax.random.normal(k, (3, 3, ci, co), jnp.float32) * 0.05
    conv_b = lambda k, co: jax.random.normal(k, (1, co), jnp.float32) * 0.05
    return {
        'w_up':   conv_w(ks[0], c_in, c_out),
        'b_up':   conv_b(ks[1], c_out),
        'w_bbox': conv_w(ks[2], c_out, NUM_PRIORS * 4),
        'b_bbox': conv_b(ks[3], NUM_PRIORS * 4),
        'w_conf': conv_w(ks[4], c_out, NUM_PRIORS * NUM_CLASSES),
        'b_conf': conv_b(ks[5], NUM_PRIORS * NUM_CLASSES),
        'w_mask': conv_w(ks[6], c_out, NUM_PRIORS * MASK_DIM),
        'b_mask': conv_b(ks[7], NUM_PRIORS * MASK_DIM),
    }


# ---------------- pure-JAX reference (matches the kernel's bf16 operand rounding) ----
def reference_forward(x_nchw, params):
    f32, bf16 = jnp.float32, jnp.bfloat16
    x = jnp.transpose(x_nchw, (0, 2, 3, 1)).astype(f32)
    xq = x.astype(bf16).astype(f32)

    def conv(v, w, b):
        wq = w.astype(bf16).astype(f32)
        y = jax.lax.conv_general_dilated(
            v, wq, (1, 1), 'SAME',
            dimension_numbers=('NHWC', 'HWIO', 'NHWC'),
            precision=jax.lax.Precision.HIGHEST)
        return y + b.reshape(1, 1, 1, -1)

    h = jax.nn.relu(conv(xq, params['w_up'], params['b_up']))
    hq = h.astype(bf16).astype(f32)
    B = h.shape[0]
    bbox = conv(hq, params['w_bbox'], params['b_bbox']).reshape(B, -1, 4)
    conf = conv(hq, params['w_conf'], params['b_conf']).reshape(B, -1, NUM_CLASSES)
    mask = jnp.tanh(conv(hq, params['w_mask'], params['b_mask'])).reshape(B, -1, MASK_DIM)
    return bbox, conf, mask


if __name__ == "__main__":
    key = jax.random.PRNGKey(0)
    kx, kp = jax.random.split(key)

    B, C_IN, H, W = 2, 32, 8, 8
    HEAD_CH = 32

    x = jax.random.normal(kx, (B, C_IN, H, W), jnp.float32)
    params = init_params(kp, C_IN, HEAD_CH)
    prep = prepare_params(params)        # one-time weight fusion / bf16 layout prep

    preds = prediction_module_forward(x, prep)
    jax.block_until_ready(preds)

    ref_loc, ref_conf, ref_mask = reference_forward(x, params)
    np.testing.assert_allclose(np.asarray(preds['loc']),  np.asarray(ref_loc),  rtol=1e-3, atol=1e-3)
    np.testing.assert_allclose(np.asarray(preds['conf']), np.asarray(ref_conf), rtol=1e-3, atol=1e-3)
    np.testing.assert_allclose(np.asarray(preds['mask']), np.asarray(ref_mask), rtol=1e-3, atol=1e-3)

    assert preds['loc'].shape    == (B, H * W * NUM_PRIORS, 4)
    assert preds['conf'].shape   == (B, H * W * NUM_PRIORS, NUM_CLASSES)
    assert preds['mask'].shape   == (B, H * W * NUM_PRIORS, MASK_DIM)
    assert preds['priors'].shape == (H * W * NUM_PRIORS, 4)

    print("KERNEL_OK")
</pallas_src>

<mosaic_0001>
module attributes {stable_mosaic.version = 11 : i64} {
  func.func @kernel(%arg0: i32, %arg1: memref<64x32xbf16, #tpu.memory_space<vmem>>, %arg2: memref<9x32x32xbf16, #tpu.memory_space<vmem>>, %arg3: memref<1x32xf32, #tpu.memory_space<vmem>>, %arg4: memref<9x32x128xbf16, #tpu.memory_space<vmem>>, %arg5: memref<1x128xf32, #tpu.memory_space<vmem>>, %arg6: memref<1x128xf32, #tpu.memory_space<vmem>>, %arg7: memref<64x128xf32, #tpu.memory_space<vmem>>) attributes {dimension_semantics = [#tpu.dimension_semantics<parallel>], iteration_bounds = array<i64: 2>, scalar_prefetch = 0 : i64, scratch_operands = 0 : i64, tpu.core_type = #tpu.core_type<tc>, window_params = [{transform_indices = @transform_0, window_bounds = array<i64: 64, 32>}, {pipeline_mode = #tpu.pipeline_mode<synchronous>, transform_indices = @transform_1, window_bounds = array<i64: 9, 32, 32>}, {pipeline_mode = #tpu.pipeline_mode<synchronous>, transform_indices = @transform_2, window_bounds = array<i64: 1, 32>}, {pipeline_mode = #tpu.pipeline_mode<synchronous>, transform_indices = @transform_3, window_bounds = array<i64: 9, 32, 128>}, {pipeline_mode = #tpu.pipeline_mode<synchronous>, transform_indices = @transform_4, window_bounds = array<i64: 1, 128>}, {pipeline_mode = #tpu.pipeline_mode<synchronous>, transform_indices = @transform_5, window_bounds = array<i64: 1, 128>}, {transform_indices = @transform_6, window_bounds = array<i64: 64, 128>}]} {
    %0 = tpu.iota {dimensions = array<i32: 0>} : vector<64x1xi32>
    %c7_i32 = arith.constant 7 : i32
    %1 = vector.broadcast %c7_i32 : i32 to vector<64x1xi32>
    %2 = arith.andi %0, %1 : vector<64x1xi32>
    %c8_i32 = arith.constant 8 : i32
    %3 = vector.broadcast %c8_i32 : i32 to vector<64x1xi32>
    %4 = arith.cmpi sge, %0, %3 : vector<64x1xi32>
    %c1_i32 = arith.constant 1 : i32
    %5 = vector.broadcast %c1_i32 : i32 to vector<64x1xi32>
    %6 = arith.cmpi sge, %2, %5 : vector<64x1xi32>
    %7 = arith.andi %4, %6 : vector<64x1xi1>
    %8 = arith.extui %7 : vector<64x1xi1> to vector<64x1xi32>
    %9 = arith.sitofp %8 : vector<64x1xi32> to vector<64x1xf32>
    %c8_i32_0 = arith.constant 8 : i32
    %10 = vector.broadcast %c8_i32_0 : i32 to vector<64x1xi32>
    %11 = arith.cmpi sge, %0, %10 : vector<64x1xi32>
    %12 = arith.extui %11 : vector<64x1xi1> to vector<64x1xi32>
    %13 = arith.sitofp %12 : vector<64x1xi32> to vector<64x1xf32>
    %c8_i32_1 = arith.constant 8 : i32
    %14 = vector.broadcast %c8_i32_1 : i32 to vector<64x1xi32>
    %15 = arith.cmpi sge, %0, %14 : vector<64x1xi32>
    %c7_i32_2 = arith.constant 7 : i32
    %16 = vector.broadcast %c7_i32_2 : i32 to vector<64x1xi32>
    %17 = arith.cmpi slt, %2, %16 : vector<64x1xi32>
    %18 = arith.andi %15, %17 : vector<64x1xi1>
    %19 = arith.extui %18 : vector<64x1xi1> to vector<64x1xi32>
    %20 = arith.sitofp %19 : vector<64x1xi32> to vector<64x1xf32>
    %c1_i32_3 = arith.constant 1 : i32
    %21 = vector.broadcast %c1_i32_3 : i32 to vector<64x1xi32>
    %22 = arith.cmpi sge, %2, %21 : vector<64x1xi32>
    %23 = arith.extui %22 : vector<64x1xi1> to vector<64x1xi32>
    %24 = arith.sitofp %23 : vector<64x1xi32> to vector<64x1xf32>
    %c7_i32_4 = arith.constant 7 : i32
    %25 = vector.broadcast %c7_i32_4 : i32 to vector<64x1xi32>
    %26 = arith.cmpi slt, %2, %25 : vector<64x1xi32>
    %27 = arith.extui %26 : vector<64x1xi1> to vector<64x1xi32>
    %28 = arith.sitofp %27 : vector<64x1xi32> to vector<64x1xf32>
    %c56_i32 = arith.constant 56 : i32
    %29 = vector.broadcast %c56_i32 : i32 to vector<64x1xi32>
    %30 = arith.cmpi slt, %0, %29 : vector<64x1xi32>
    %c1_i32_5 = arith.constant 1 : i32
    %31 = vector.broadcast %c1_i32_5 : i32 to vector<64x1xi32>
    %32 = arith.cmpi sge, %2, %31 : vector<64x1xi32>
    %33 = arith.andi %30, %32 : vector<64x1xi1>
    %34 = arith.extui %33 : vector<64x1xi1> to vector<64x1xi32>
    %35 = arith.sitofp %34 : vector<64x1xi32> to vector<64x1xf32>
    %c56_i32_6 = arith.constant 56 : i32
    %36 = vector.broadcast %c56_i32_6 : i32 to vector<64x1xi32>
    %37 = arith.cmpi slt, %0, %36 : vector<64x1xi32>
    %38 = arith.extui %37 : vector<64x1xi1> to vector<64x1xi32>
    %39 = arith.sitofp %38 : vector<64x1xi32> to vector<64x1xf32>
    %c56_i32_7 = arith.constant 56 : i32
    %40 = vector.broadcast %c56_i32_7 : i32 to vector<64x1xi32>
    %41 = arith.cmpi slt, %0, %40 : vector<64x1xi32>
    %c7_i32_8 = arith.constant 7 : i32
    %42 = vector.broadcast %c7_i32_8 : i32 to vector<64x1xi32>
    %43 = arith.cmpi slt, %2, %42 : vector<64x1xi32>
    %44 = arith.andi %41, %43 : vector<64x1xi1>
    %45 = arith.extui %44 : vector<64x1xi1> to vector<64x1xi32>
    %46 = arith.sitofp %45 : vector<64x1xi32> to vector<64x1xf32>
    %c0 = arith.constant 0 : index
    %c0_9 = arith.constant 0 : index
    %47 = vector.load %arg1[%c0, %c0_9] : memref<64x32xbf16, #tpu.memory_space<vmem>>, vector<64x32xbf16>
    %48 = arith.extf %47 : vector<64x32xbf16> to vector<64x32xf32>
    %c9_i32 = arith.constant 9 : i32
    %49 = tpu.dynamic_rotate %48 by %c9_i32 dim 0 : vector<64x32xf32>, i32 -> vector<64x32xf32>
    %50 = vector.broadcast %9 : vector<64x1xf32> to vector<64x32xf32>
    %51 = arith.mulf %49, %50 : vector<64x32xf32>
    %52 = arith.truncf %51 : vector<64x32xf32> to vector<64x32xbf16>
    %c0_10 = arith.constant 0 : index
    %c0_11 = arith.constant 0 : index
    %c0_12 = arith.constant 0 : index
    %53 = vector.load %arg2[%c0_10, %c0_11, %c0_12] : memref<9x32x32xbf16, #tpu.memory_space<vmem>>, vector<1x32x32xbf16>
    %54 = vector.shape_cast %53 : vector<1x32x32xbf16> to vector<32x32xbf16>
    %cst = arith.constant dense<0.000000e+00> : vector<64x32xf32>
    %55 = tpu.matmul %52, %54, %cst {dimension_numbers = #tpu.dot_dimension_numbers<[1], [0], [0], [1], [0, 0, 1, 1], [], []>} : vector<64x32xbf16>, vector<32x32xbf16>, vector<64x32xf32> -> vector<64x32xf32>
    %c8_i32_13 = arith.constant 8 : i32
    %56 = tpu.dynamic_rotate %48 by %c8_i32_13 dim 0 : vector<64x32xf32>, i32 -> vector<64x32xf32>
    %57 = vector.broadcast %13 : vector<64x1xf32> to vector<64x32xf32>
    %58 = arith.mulf %56, %57 : vector<64x32xf32>
    %59 = arith.truncf %58 : vector<64x32xf32> to vector<64x32xbf16>
    %c1 = arith.constant 1 : index
    %c0_14 = arith.constant 0 : index
    %c0_15 = arith.constant 0 : index
    %60 = vector.load %arg2[%c1, %c0_14, %c0_15] : memref<9x32x32xbf16, #tpu.memory_space<vmem>>, vector<1x32x32xbf16>
    %61 = vector.shape_cast %60 : vector<1x32x32xbf16> to vector<32x32xbf16>
    %cst_16 = arith.constant dense<0.000000e+00> : vector<64x32xf32>
    %62 = tpu.matmul %59, %61, %cst_16 {dimension_numbers = #tpu.dot_dimension_numbers<[1], [0], [0], [1], [0, 0, 1, 1], [], []>} : vector<64x32xbf16>, vector<32x32xbf16>, vector<64x32xf32> -> vector<64x32xf32>
    %63 = arith.addf %55, %62 : vector<64x32xf32>
    %c7_i32_17 = arith.constant 7 : i32
    %64 = tpu.dynamic_rotate %48 by %c7_i32_17 dim 0 : vector<64x32xf32>, i32 -> vector<64x32xf32>
    %65 = vector.broadcast %20 : vector<64x1xf32> to vector<64x32xf32>
    %66 = arith.mulf %64, %65 : vector<64x32xf32>
    %67 = arith.truncf %66 : vector<64x32xf32> to vector<64x32xbf16>
    %c2 = arith.constant 2 : index
    %c0_18 = arith.constant 0 : index
    %c0_19 = arith.constant 0 : index
    %68 = vector.load %arg2[%c2, %c0_18, %c0_19] : memref<9x32x32xbf16, #tpu.memory_space<vmem>>, vector<1x32x32xbf16>
    %69 = vector.shape_cast %68 : vector<1x32x32xbf16> to vector<32x32xbf16>
    %cst_20 = arith.constant dense<0.000000e+00> : vector<64x32xf32>
    %70 = tpu.matmul %67, %69, %cst_20 {dimension_numbers = #tpu.dot_dimension_numbers<[1], [0], [0], [1], [0, 0, 1, 1], [], []>} : vector<64x32xbf16>, vector<32x32xbf16>, vector<64x32xf32> -> vector<64x32xf32>
    %71 = arith.addf %63, %70 : vector<64x32xf32>
    %c1_i32_21 = arith.constant 1 : i32
    %72 = tpu.dynamic_rotate %48 by %c1_i32_21 dim 0 : vector<64x32xf32>, i32 -> vector<64x32xf32>
    %73 = vector.broadcast %24 : vector<64x1xf32> to vector<64x32xf32>
    %74 = arith.mulf %72, %73 : vector<64x32xf32>
    %75 = arith.truncf %74 : vector<64x32xf32> to vector<64x32xbf16>
    %c3 = arith.constant 3 : index
    %c0_22 = arith.constant 0 : index
    %c0_23 = arith.constant 0 : index
    %76 = vector.load %arg2[%c3, %c0_22, %c0_23] : memref<9x32x32xbf16, #tpu.memory_space<vmem>>, vector<1x32x32xbf16>
    %77 = vector.shape_cast %76 : vector<1x32x32xbf16> to vector<32x32xbf16>
    %cst_24 = arith.constant dense<0.000000e+00> : vector<64x32xf32>
    %78 = tpu.matmul %75, %77, %cst_24 {dimension_numbers = #tpu.dot_dimension_numbers<[1], [0], [0], [1], [0, 0, 1, 1], [], []>} : vector<64x32xbf16>, vector<32x32xbf16>, vector<64x32xf32> -> vector<64x32xf32>
    %79 = arith.addf %71, %78 : vector<64x32xf32>
    %80 = arith.truncf %48 : vector<64x32xf32> to vector<64x32xbf16>
    %c4 = arith.constant 4 : index
    %c0_25 = arith.constant 0 : index
    %c0_26 = arith.constant 0 : index
    %81 = vector.load %arg2[%c4, %c0_25, %c0_26] : memref<9x32x32xbf16, #tpu.memory_space<vmem>>, vector<1x32x32xbf16>
    %82 = vector.shape_cast %81 : vector<1x32x32xbf16> to vector<32x32xbf16>
    %cst_27 = arith.constant dense<0.000000e+00> : vector<64x32xf32>
    %83 = tpu.matmul %80, %82, %cst_27 {dimension_numbers = #tpu.dot_dimension_numbers<[1], [0], [0], [1], [0, 0, 1, 1], [], []>} : vector<64x32xbf16>, vector<32x32xbf16>, vector<64x32xf32> -> vector<64x32xf32>
    %84 = arith.addf %79, %83 : vector<64x32xf32>
    %c63_i32 = arith.constant 63 : i32
    %85 = tpu.dynamic_rotate %48 by %c63_i32 dim 0 : vector<64x32xf32>, i32 -> vector<64x32xf32>
    %86 = vector.broadcast %28 : vector<64x1xf32> to vector<64x32xf32>
    %87 = arith.mulf %85, %86 : vector<64x32xf32>
    %88 = arith.truncf %87 : vector<64x32xf32> to vector<64x32xbf16>
    %c5 = arith.constant 5 : index
    %c0_28 = arith.constant 0 : index
    %c0_29 = arith.constant 0 : index
    %89 = vector.load %arg2[%c5, %c0_28, %c0_29] : memref<9x32x32xbf16, #tpu.memory_space<vmem>>, vector<1x32x32xbf16>
    %90 = vector.shape_cast %89 : vector<1x32x32xbf16> to vector<32x32xbf16>
    %cst_30 = arith.constant dense<0.000000e+00> : vector<64x32xf32>
    %91 = tpu.matmul %88, %90, %cst_30 {dimension_numbers = #tpu.dot_dimension_numbers<[1], [0], [0], [1], [0, 0, 1, 1], [], []>} : vector<64x32xbf16>, vector<32x32xbf16>, vector<64x32xf32> -> vector<64x32xf32>
    %92 = arith.addf %84, %91 : vector<64x32xf32>
    %c57_i32 = arith.constant 57 : i32
    %93 = tpu.dynamic_rotate %48 by %c57_i32 dim 0 : vector<64x32xf32>, i32 -> vector<64x32xf32>
    %94 = vector.broadcast %35 : vector<64x1xf32> to vector<64x32xf32>
    %95 = arith.mulf %93, %94 : vector<64x32xf32>
    %96 = arith.truncf %95 : vector<64x32xf32> to vector<64x32xbf16>
    %c6 = arith.constant 6 : index
    %c0_31 = arith.constant 0 : index
    %c0_32 = arith.constant 0 : index
    %97 = vector.load %arg2[%c6, %c0_31, %c0_32] : memref<9x32x32xbf16, #tpu.memory_space<vmem>>, vector<1x32x32xbf16>
    %98 = vector.shape_cast %97 : vector<1x32x32xbf16> to vector<32x32xbf16>
    %cst_33 = arith.constant dense<0.000000e+00> : vector<64x32xf32>
    %99 = tpu.matmul %96, %98, %cst_33 {dimension_numbers = #tpu.dot_dimension_numbers<[1], [0], [0], [1], [0, 0, 1, 1], [], []>} : vector<64x32xbf16>, vector<32x32xbf16>, vector<64x32xf32> -> vector<64x32xf32>
    %100 = arith.addf %92, %99 : vector<64x32xf32>
    %c56_i32_34 = arith.constant 56 : i32
    %101 = tpu.dynamic_rotate %48 by %c56_i32_34 dim 0 : vector<64x32xf32>, i32 -> vector<64x32xf32>
    %102 = vector.broadcast %39 : vector<64x1xf32> to vector<64x32xf32>
    %103 = arith.mulf %101, %102 : vector<64x32xf32>
    %104 = arith.truncf %103 : vector<64x32xf32> to vector<64x32xbf16>
    %c7 = arith.constant 7 : index
    %c0_35 = arith.constant 0 : index
    %c0_36 = arith.constant 0 : index
    %105 = vector.load %arg2[%c7, %c0_35, %c0_36] : memref<9x32x32xbf16, #tpu.memory_space<vmem>>, vector<1x32x32xbf16>
    %106 = vector.shape_cast %105 : vector<1x32x32xbf16> to vector<32x32xbf16>
    %cst_37 = arith.constant dense<0.000000e+00> : vector<64x32xf32>
    %107 = tpu.matmul %104, %106, %cst_37 {dimension_numbers = #tpu.dot_dimension_numbers<[1], [0], [0], [1], [0, 0, 1, 1], [], []>} : vector<64x32xbf16>, vector<32x32xbf16>, vector<64x32xf32> -> vector<64x32xf32>
    %108 = arith.addf %100, %107 : vector<64x32xf32>
    %c55_i32 = arith.constant 55 : i32
    %109 = tpu.dynamic_rotate %48 by %c55_i32 dim 0 : vector<64x32xf32>, i32 -> vector<64x32xf32>
    %110 = vector.broadcast %46 : vector<64x1xf32> to vector<64x32xf32>
    %111 = arith.mulf %109, %110 : vector<64x32xf32>
    %112 = arith.truncf %111 : vector<64x32xf32> to vector<64x32xbf16>
    %c8 = arith.constant 8 : index
    %c0_38 = arith.constant 0 : index
    %c0_39 = arith.constant 0 : index
    %113 = vector.load %arg2[%c8, %c0_38, %c0_39] : memref<9x32x32xbf16, #tpu.memory_space<vmem>>, vector<1x32x32xbf16>
    %114 = vector.shape_cast %113 : vector<1x32x32xbf16> to vector<32x32xbf16>
    %cst_40 = arith.constant dense<0.000000e+00> : vector<64x32xf32>
    %115 = tpu.matmul %112, %114, %cst_40 {dimension_numbers = #tpu.dot_dimension_numbers<[1], [0], [0], [1], [0, 0, 1, 1], [], []>} : vector<64x32xbf16>, vector<32x32xbf16>, vector<64x32xf32> -> vector<64x32xf32>
    %116 = arith.addf %108, %115 : vector<64x32xf32>
    %c0_41 = arith.constant 0 : index
    %c0_42 = arith.constant 0 : index
    %117 = vector.load %arg3[%c0_41, %c0_42] : memref<1x32xf32, #tpu.memory_space<vmem>>, vector<1x32xf32>
    %118 = vector.broadcast %117 : vector<1x32xf32> to vector<64x32xf32>
    %119 = arith.addf %116, %118 : vector<64x32xf32>
    %cst_43 = arith.constant 0.000000e+00 : f32
    %120 = vector.broadcast %cst_43 : f32 to vector<64x32xf32>
    %121 = arith.maximumf %119, %120 : vector<64x32xf32>
    %c9_i32_44 = arith.constant 9 : i32
    %122 = tpu.dynamic_rotate %121 by %c9_i32_44 dim 0 : vector<64x32xf32>, i32 -> vector<64x32xf32>
    %123 = vector.broadcast %9 : vector<64x1xf32> to vector<64x32xf32>
    %124 = arith.mulf %122, %123 : vector<64x32xf32>
    %125 = arith.truncf %124 : vector<64x32xf32> to vector<64x32xbf16>
    %c0_45 = arith.constant 0 : index
    %c0_46 = arith.constant 0 : index
    %c0_47 = arith.constant 0 : index
    %126 = vector.load %arg4[%c0_45, %c0_46, %c0_47] : memref<9x32x128xbf16, #tpu.memory_space<vmem>>, vector<1x32x128xbf16>
    %127 = vector.shape_cast %126 : vector<1x32x128xbf16> to vector<32x128xbf16>
    %cst_48 = arith.constant dense<0.000000e+00> : vector<64x128xf32>
    %128 = tpu.matmul %125, %127, %cst_48 {dimension_numbers = #tpu.dot_dimension_numbers<[1], [0], [0], [1], [0, 0, 1, 1], [], []>} : vector<64x32xbf16>, vector<32x128xbf16>, vector<64x128xf32> -> vector<64x128xf32>
    %c8_i32_49 = arith.constant 8 : i32
    %129 = tpu.dynamic_rotate %121 by %c8_i32_49 dim 0 : vector<64x32xf32>, i32 -> vector<64x32xf32>
    %130 = vector.broadcast %13 : vector<64x1xf32> to vector<64x32xf32>
    %131 = arith.mulf %129, %130 : vector<64x32xf32>
    %132 = arith.truncf %131 : vector<64x32xf32> to vector<64x32xbf16>
    %c1_50 = arith.constant 1 : index
    %c0_51 = arith.constant 0 : index
    %c0_52 = arith.constant 0 : index
    %133 = vector.load %arg4[%c1_50, %c0_51, %c0_52] : memref<9x32x128xbf16, #tpu.memory_space<vmem>>, vector<1x32x128xbf16>
    %134 = vector.shape_cast %133 : vector<1x32x128xbf16> to vector<32x128xbf16>
    %cst_53 = arith.constant dense<0.000000e+00> : vector<64x128xf32>
    %135 = tpu.matmul %132, %134, %cst_53 {dimension_numbers = #tpu.dot_dimension_numbers<[1], [0], [0], [1], [0, 0, 1, 1], [], []>} : vector<64x32xbf16>, vector<32x128xbf16>, vector<64x128xf32> -> vector<64x128xf32>
    %136 = arith.addf %128, %135 : vector<64x128xf32>
    %c7_i32_54 = arith.constant 7 : i32
    %137 = tpu.dynamic_rotate %121 by %c7_i32_54 dim 0 : vector<64x32xf32>, i32 -> vector<64x32xf32>
    %138 = vector.broadcast %20 : vector<64x1xf32> to vector<64x32xf32>
    %139 = arith.mulf %137, %138 : vector<64x32xf32>
    %140 = arith.truncf %139 : vector<64x32xf32> to vector<64x32xbf16>
    %c2_55 = arith.constant 2 : index
    %c0_56 = arith.constant 0 : index
    %c0_57 = arith.constant 0 : index
    %141 = vector.load %arg4[%c2_55, %c0_56, %c0_57] : memref<9x32x128xbf16, #tpu.memory_space<vmem>>, vector<1x32x128xbf16>
    %142 = vector.shape_cast %141 : vector<1x32x128xbf16> to vector<32x128xbf16>
    %cst_58 = arith.constant dense<0.000000e+00> : vector<64x128xf32>
    %143 = tpu.matmul %140, %142, %cst_58 {dimension_numbers = #tpu.dot_dimension_numbers<[1], [0], [0], [1], [0, 0, 1, 1], [], []>} : vector<64x32xbf16>, vector<32x128xbf16>, vector<64x128xf32> -> vector<64x128xf32>
    %144 = arith.addf %136, %143 : vector<64x128xf32>
    %c1_i32_59 = arith.constant 1 : i32
    %145 = tpu.dynamic_rotate %121 by %c1_i32_59 dim 0 : vector<64x32xf32>, i32 -> vector<64x32xf32>
    %146 = vector.broadcast %24 : vector<64x1xf32> to vector<64x32xf32>
    %147 = arith.mulf %145, %146 : vector<64x32xf32>
    %148 = arith.truncf %147 : vector<64x32xf32> to vector<64x32xbf16>
    %c3_60 = arith.constant 3 : index
    %c0_61 = arith.constant 0 : index
    %c0_62 = arith.constant 0 : index
    %149 = vector.load %arg4[%c3_60, %c0_61, %c0_62] : memref<9x32x128xbf16, #tpu.memory_space<vmem>>, vector<1x32x128xbf16>
    %150 = vector.shape_cast %149 : vector<1x32x128xbf16> to vector<32x128xbf16>
    %cst_63 = arith.constant dense<0.000000e+00> : vector<64x128xf32>
    %151 = tpu.matmul %148, %150, %cst_63 {dimension_numbers = #tpu.dot_dimension_numbers<[1], [0], [0], [1], [0, 0, 1, 1], [], []>} : vector<64x32xbf16>, vector<32x128xbf16>, vector<64x128xf32> -> vector<64x128xf32>
    %152 = arith.addf %144, %151 : vector<64x128xf32>
    %153 = arith.truncf %121 : vector<64x32xf32> to vector<64x32xbf16>
    %c4_64 = arith.constant 4 : index
    %c0_65 = arith.constant 0 : index
    %c0_66 = arith.constant 0 : index
    %154 = vector.load %arg4[%c4_64, %c0_65, %c0_66] : memref<9x32x128xbf16, #tpu.memory_space<vmem>>, vector<1x32x128xbf16>
    %155 = vector.shape_cast %154 : vector<1x32x128xbf16> to vector<32x128xbf16>
    %cst_67 = arith.constant dense<0.000000e+00> : vector<64x128xf32>
    %156 = tpu.matmul %153, %155, %cst_67 {dimension_numbers = #tpu.dot_dimension_numbers<[1], [0], [0], [1], [0, 0, 1, 1], [], []>} : vector<64x32xbf16>, vector<32x128xbf16>, vector<64x128xf32> -> vector<64x128xf32>
    %157 = arith.addf %152, %156 : vector<64x128xf32>
    %c63_i32_68 = arith.constant 63 : i32
    %158 = tpu.dynamic_rotate %121 by %c63_i32_68 dim 0 : vector<64x32xf32>, i32 -> vector<64x32xf32>
    %159 = vector.broadcast %28 : vector<64x1xf32> to vector<64x32xf32>
    %160 = arith.mulf %158, %159 : vector<64x32xf32>
    %161 = arith.truncf %160 : vector<64x32xf32> to vector<64x32xbf16>
    %c5_69 = arith.constant 5 : index
    %c0_70 = arith.constant 0 : index
    %c0_71 = arith.constant 0 : index
    %162 = vector.load %arg4[%c5_69, %c0_70, %c0_71] : memref<9x32x128xbf16, #tpu.memory_space<vmem>>, vector<1x32x128xbf16>
    %163 = vector.shape_cast %162 : vector<1x32x128xbf16> to vector<32x128xbf16>
    %cst_72 = arith.constant dense<0.000000e+00> : vector<64x128xf32>
    %164 = tpu.matmul %161, %163, %cst_72 {dimension_numbers = #tpu.dot_dimension_numbers<[1], [0], [0], [1], [0, 0, 1, 1], [], []>} : vector<64x32xbf16>, vector<32x128xbf16>, vector<64x128xf32> -> vector<64x128xf32>
    %165 = arith.addf %157, %164 : vector<64x128xf32>
    %c57_i32_73 = arith.constant 57 : i32
    %166 = tpu.dynamic_rotate %121 by %c57_i32_73 dim 0 : vector<64x32xf32>, i32 -> vector<64x32xf32>
    %167 = vector.broadcast %35 : vector<64x1xf32> to vector<64x32xf32>
    %168 = arith.mulf %166, %167 : vector<64x32xf32>
    %169 = arith.truncf %168 : vector<64x32xf32> to vector<64x32xbf16>
    %c6_74 = arith.constant 6 : index
    %c0_75 = arith.constant 0 : index
    %c0_76 = arith.constant 0 : index
    %170 = vector.load %arg4[%c6_74, %c0_75, %c0_76] : memref<9x32x128xbf16, #tpu.memory_space<vmem>>, vector<1x32x128xbf16>
    %171 = vector.shape_cast %170 : vector<1x32x128xbf16> to vector<32x128xbf16>
    %cst_77 = arith.constant dense<0.000000e+00> : vector<64x128xf32>
    %172 = tpu.matmul %169, %171, %cst_77 {dimension_numbers = #tpu.dot_dimension_numbers<[1], [0], [0], [1], [0, 0, 1, 1], [], []>} : vector<64x32xbf16>, vector<32x128xbf16>, vector<64x128xf32> -> vector<64x128xf32>
    %173 = arith.addf %165, %172 : vector<64x128xf32>
    %c56_i32_78 = arith.constant 56 : i32
    %174 = tpu.dynamic_rotate %121 by %c56_i32_78 dim 0 : vector<64x32xf32>, i32 -> vector<64x32xf32>
    %175 = vector.broadcast %39 : vector<64x1xf32> to vector<64x32xf32>
    %176 = arith.mulf %174, %175 : vector<64x32xf32>
    %177 = arith.truncf %176 : vector<64x32xf32> to vector<64x32xbf16>
    %c7_79 = arith.constant 7 : index
    %c0_80 = arith.constant 0 : index
    %c0_81 = arith.constant 0 : index
    %178 = vector.load %arg4[%c7_79, %c0_80, %c0_81] : memref<9x32x128xbf16, #tpu.memory_space<vmem>>, vector<1x32x128xbf16>
    %179 = vector.shape_cast %178 : vector<1x32x128xbf16> to vector<32x128xbf16>
    %cst_82 = arith.constant dense<0.000000e+00> : vector<64x128xf32>
    %180 = tpu.matmul %177, %179, %cst_82 {dimension_numbers = #tpu.dot_dimension_numbers<[1], [0], [0], [1], [0, 0, 1, 1], [], []>} : vector<64x32xbf16>, vector<32x128xbf16>, vector<64x128xf32> -> vector<64x128xf32>
    %181 = arith.addf %173, %180 : vector<64x128xf32>
    %c55_i32_83 = arith.constant 55 : i32
    %182 = tpu.dynamic_rotate %121 by %c55_i32_83 dim 0 : vector<64x32xf32>, i32 -> vector<64x32xf32>
    %183 = vector.broadcast %46 : vector<64x1xf32> to vector<64x32xf32>
    %184 = arith.mulf %182, %183 : vector<64x32xf32>
    %185 = arith.truncf %184 : vector<64x32xf32> to vector<64x32xbf16>
    %c8_84 = arith.constant 8 : index
    %c0_85 = arith.constant 0 : index
    %c0_86 = arith.constant 0 : index
    %186 = vector.load %arg4[%c8_84, %c0_85, %c0_86] : memref<9x32x128xbf16, #tpu.memory_space<vmem>>, vector<1x32x128xbf16>
    %187 = vector.shape_cast %186 : vector<1x32x128xbf16> to vector<32x128xbf16>
    %cst_87 = arith.constant dense<0.000000e+00> : vector<64x128xf32>
    %188 = tpu.matmul %185, %187, %cst_87 {dimension_numbers = #tpu.dot_dimension_numbers<[1], [0], [0], [1], [0, 0, 1, 1], [], []>} : vector<64x32xbf16>, vector<32x128xbf16>, vector<64x128xf32> -> vector<64x128xf32>
    %189 = arith.addf %181, %188 : vector<64x128xf32>
    %c0_88 = arith.constant 0 : index
    %c0_89 = arith.constant 0 : index
    %190 = vector.load %arg5[%c0_88, %c0_89] : memref<1x128xf32, #tpu.memory_space<vmem>>, vector<1x128xf32>
    %191 = vector.broadcast %190 : vector<1x128xf32> to vector<64x128xf32>
    %192 = arith.addf %189, %191 : vector<64x128xf32>
    %c0_90 = arith.constant 0 : index
    %c0_91 = arith.constant 0 : index
    %193 = vector.load %arg6[%c0_90, %c0_91] : memref<1x128xf32, #tpu.memory_space<vmem>>, vector<1x128xf32>
    %194 = math.tanh %192 : vector<64x128xf32>
    %195 = arith.subf %194, %192 : vector<64x128xf32>
    %196 = vector.broadcast %193 : vector<1x128xf32> to vector<64x128xf32>
    %197 = arith.mulf %196, %195 : vector<64x128xf32>
    %198 = arith.addf %192, %197 : vector<64x128xf32>
    %c0_92 = arith.constant 0 : index
    %c0_93 = arith.constant 0 : index
    %199 = vector.load %arg7[%c0_92, %c0_93] : memref<64x128xf32, #tpu.memory_space<vmem>>, vector<64x128xf32>
    tpu.vector_store %arg7[%c0_92, %c0_93], %198 {strides = array<i32>} : memref<64x128xf32, #tpu.memory_space<vmem>>, vector<64x128xf32>,
    return
  }
  func.func @transform_0(%arg0: i32) -> (i32, i32) {
    %c0_i32 = arith.constant 0 : i32
    %c0_i32_0 = arith.constant 0 : i32
    return %arg0, %c0_i32 : i32, i32
  }
  func.func @transform_1(%arg0: i32) -> (i32, i32, i32) {
    %c0_i32 = arith.constant 0 : i32
    %c0_i32_0 = arith.constant 0 : i32
    %c0_i32_1 = arith.constant 0 : i32
    %c0_i32_2 = arith.constant 0 : i32
    return %c0_i32, %c0_i32_0, %c0_i32_1 : i32, i32, i32
  }
  func.func @transform_2(%arg0: i32) -> (i32, i32) {
    %c0_i32 = arith.constant 0 : i32
    %c0_i32_0 = arith.constant 0 : i32
    %c0_i32_1 = arith.constant 0 : i32
    return %c0_i32, %c0_i32_0 : i32, i32
  }
  func.func @transform_3(%arg0: i32) -> (i32, i32, i32) {
    %c0_i32 = arith.constant 0 : i32
    %c0_i32_0 = arith.constant 0 : i32
    %c0_i32_1 = arith.constant 0 : i32
    %c0_i32_2 = arith.constant 0 : i32
    return %c0_i32, %c0_i32_0, %c0_i32_1 : i32, i32, i32
  }
  func.func @transform_4(%arg0: i32) -> (i32, i32) {
    %c0_i32 = arith.constant 0 : i32
    %c0_i32_0 = arith.constant 0 : i32
    %c0_i32_1 = arith.constant 0 : i32
    return %c0_i32, %c0_i32_0 : i32, i32
  }
  func.func @transform_5(%arg0: i32) -> (i32, i32) {
    %c0_i32 = arith.constant 0 : i32
    %c0_i32_0 = arith.constant 0 : i32
    %c0_i32_1 = arith.constant 0 : i32
    return %c0_i32, %c0_i32_0 : i32, i32
  }
  func.func @transform_6(%arg0: i32) -> (i32, i32) {
    %c0_i32 = arith.constant 0 : i32
    %c0_i32_0 = arith.constant 0 : i32
    return %arg0, %c0_i32 : i32, i32
  }
}

</mosaic_0001>

<llo_original>
// kernel: tpu_custom_call.1
$region0: #{tpu_custom_call.1}
  #allocation0 [shape = 'u32[]', space=smem, size = 0x4, offset = 0x4, fixed_abs, tag = 'smem constant byte address 0x4 - core index']
  #allocation1 [shape = 'u32[72,128]{1,0:T(1,128)}', space=vmem, size = 0x9000, scoped, tag = 'internal scratch']
  %s0 = inlined_call_operand.vmem [shape: bf16[128,32], index: 0, kind: input, shape index: {}]
  %s1 = inlined_call_operand.hbm [shape: bf16[9,32,32], index: 1, kind: input, shape index: {}]
  %s2 = inlined_call_operand.vmem [shape: f32[1,32], index: 2, kind: input, shape index: {}]
  %s3 = inlined_call_operand.hbm [shape: bf16[9,32,128], index: 3, kind: input, shape index: {}]
  %s4 = inlined_call_operand.vmem [shape: f32[1,128], index: 4, kind: input, shape index: {}]
  %s5 = inlined_call_operand.vmem [shape: f32[1,128], index: 5, kind: input, shape index: {}]
  %s6 = inlined_call_operand.hbm [shape: f32[128,128], index: 6, kind: output, shape index: {}]
  %s7 = sld [smem:[#allocation0]]
  $region65: #{tpu_custom_call.1} parent=0
    _
  %s9 = ssub.s32 1, %s7
  %s10 = scalar_select 0, %s9, %s7
  $region1: #{tpu_custom_call.1} parent=0
    #allocation2 [shape = 'u8[73728]{0}', space=vmem, size = 0x12000, scoped, tag = 'input window, operand 1, single buffered']
    #allocation3 [shape = 's32[2]{0}', space=sflag, size = 0x8, scoped, tag = 'scoped memory for tpu_custom_call.1']
    #allocation4 [shape = 's32[2]{0}', space=sflag, size = 0x8, scoped, tag = 'scoped memory for tpu_custom_call.1']
    #allocation5 [shape = 'u8[73728]{0}', space=vmem, size = 0x12000, scoped, tag = 'input window, operand 3, single buffered']
    #allocation6 [shape = 's32[1]{0}', space=sflag, size = 0x4, scoped, tag = 'scoped memory for tpu_custom_call.1']
    #allocation7 [shape = 'u8[65536]{0}', space=vmem, size = 0x10000, scoped, tag = 'output window, operand 0']
    %11 = vsyncpa [#allocation3], 0
    %12 = vsyncpa [#allocation6], 0
    %13 = vsyncpa [#allocation4], 0
    %s14 = scalar_lea.sflag [#allocation4], 1
    %15 = vsyncpa %s14, 0
    loop: start=0, step=1, limit=4
    $region2: #{tpu_custom_call.1} parent=1 // loop_pre_header
      _
    $region3: #{tpu_custom_call.1} parent=1 // loop_header
      %s17 = sphi 0, %s21
      %p18 = scmp.ge.s32.totalorder %s17, 4
      %s27 = sphi 0, %s29
      %s30 = sphi 0, %s27
      %s31 = sphi 0, %s30
      %s47 = sphi 0, %s31
      %s51 = sphi 0, %s51
      %s53 = sphi 0, %s51
      %s54 = sphi 0, %s53
      %s68 = sphi 0, %s54
      %s72 = sphi 0, %s72
      %s74 = sphi 0, %s72
      %s75 = sphi 0, %s74
      %s89 = sphi 0, %s75
      %s93 = sphi 0, %s93
      %s95 = sphi 0, %s93
      %s96 = sphi 0, %s95
      %s110 = sphi 0, %s96
      %s114 = sphi 0, %s114
      %s116 = sphi 0, %s114
      %s117 = sphi 0, %s116
      %s131 = sphi 0, %s117
      %s135 = sphi 0, %s135
      %s137 = sphi 0, %s135
      %s138 = sphi 0, %s137
      %s152 = sphi 0, %s138
      %s158 = sphi 0, %s160
      %s161 = sphi 0, %s158
      %s162 = sphi 0, %s161
      %s178 = sphi 0, %s162
    $region4: #{tpu_custom_call.1} parent=1 // loop_header_branch
      %20 = sbr.rel (%p18) target = $region8
    $region5: #{tpu_custom_call.1} parent=1 // loop_body
      %s22 = ssub.s32 %s17, 1
      %s23 = ssub.s32 %s17, 2
      %s24 = sadd.s32 %s17, 1
      %s25 = ssub.s32 %s17, %s24
      %p26 = scmp.eq.s32.totalorder %s25, 0
      %s28 = sadd.s32 %s27, 1
      %s29 = scalar_select %p26, %s27, %s28
      %p32 = pneg %p26
      %p33 = scmp.eq.s32.totalorder %s17, 1
      %p34 = por %p32, %p33
      %p35 = scmp.ne.s32.totalorder %s27, %s30
      %p36 = scmp.eq.s32.totalorder %s17, 0
      %p37 = por %p35, %p36
      %p38 = scmp.ne.s32.totalorder %s27, %s30
      %p39 = scmp.eq.s32.totalorder %s22, 1
      %p40 = por %p38, %p39
      %p41 = scmp.ne.s32.totalorder %s30, %s31
      %p42 = scmp.eq.s32.totalorder %s22, 0
      %p43 = por %p41, %p42
      %p44 = scmp.ne.s32.totalorder %s30, %s31
      %p45 = scmp.eq.s32.totalorder %s23, 1
      %p46 = por %p44, %p45
      %p48 = scmp.ne.s32.totalorder %s31, %s47
      %p49 = scmp.eq.s32.totalorder %s23, 0
      %p50 = por %p48, %p49
      %s52 = sadd.s32 %s51, 1
      %p55 = scmp.eq.s32.totalorder %s17, 1
      %p56 = scmp.ne.s32.totalorder %s51, %s53
      %p57 = scmp.eq.s32.totalorder %s17, 0
      %p58 = por %p56, %p57
      %p59 = scmp.ne.s32.totalorder %s51, %s53
      %p60 = scmp.eq.s32.totalorder %s22, 1
      %p61 = por %p59, %p60
      %p62 = scmp.ne.s32.totalorder %s53, %s54
      %p63 = scmp.eq.s32.totalorder %s22, 0
      %p64 = por %p62, %p63
      %p65 = scmp.ne.s32.totalorder %s53, %s54
      %p66 = scmp.eq.s32.totalorder %s23, 1
      %p67 = por %p65, %p66
      %p69 = scmp.ne.s32.totalorder %s54, %s68
      %p70 = scmp.eq.s32.totalorder %s23, 0
      %p71 = por %p69, %p70
      %s73 = sadd.s32 %s72, 1
      %p76 = scmp.eq.s32.totalorder %s17, 1
      %p77 = scmp.ne.s32.totalorder %s72, %s74
      %p78 = scmp.eq.s32.totalorder %s17, 0
      %p79 = por %p77, %p78
      %p80 = scmp.ne.s32.totalorder %s72, %s74
      %p81 = scmp.eq.s32.totalorder %s22, 1
      %p82 = por %p80, %p81
      %p83 = scmp.ne.s32.totalorder %s74, %s75
      %p84 = scmp.eq.s32.totalorder %s22, 0
      %p85 = por %p83, %p84
      %p86 = scmp.ne.s32.totalorder %s74, %s75
      %p87 = scmp.eq.s32.totalorder %s23, 1
      %p88 = por %p86, %p87
      %p90 = scmp.ne.s32.totalorder %s75, %s89
      %p91 = scmp.eq.s32.totalorder %s23, 0
      %p92 = por %p90, %p91
      %s94 = sadd.s32 %s93, 1
      %p97 = scmp.eq.s32.totalorder %s17, 1
      %p98 = scmp.ne.s32.totalorder %s93, %s95
      %p99 = scmp.eq.s32.totalorder %s17, 0
      %p100 = por %p98, %p99
      %p101 = scmp.ne.s32.totalorder %s93, %s95
      %p102 = scmp.eq.s32.totalorder %s22, 1
      %p103 = por %p101, %p102
      %p104 = scmp.ne.s32.totalorder %s95, %s96
      %p105 = scmp.eq.s32.totalorder %s22, 0
      %p106 = por %p104, %p105
      %p107 = scmp.ne.s32.totalorder %s95, %s96
      %p108 = scmp.eq.s32.totalorder %s23, 1
      %p109 = por %p107, %p108
      %p111 = scmp.ne.s32.totalorder %s96, %s110
      %p112 = scmp.eq.s32.totalorder %s23, 0
      %p113 = por %p111, %p112
      %s115 = sadd.s32 %s114, 1
      %p118 = scmp.eq.s32.totalorder %s17, 1
      %p119 = scmp.ne.s32.totalorder %s114, %s116
      %p120 = scmp.eq.s32.totalorder %s17, 0
      %p121 = por %p119, %p120
      %p122 = scmp.ne.s32.totalorder %s114, %s116
      %p123 = scmp.eq.s32.totalorder %s22, 1
      %p124 = por %p122, %p123
      %p125 = scmp.ne.s32.totalorder %s116, %s117
      %p126 = scmp.eq.s32.totalorder %s22, 0
      %p127 = por %p125, %p126
      %p128 = scmp.ne.s32.totalorder %s116, %s117
      %p129 = scmp.eq.s32.totalorder %s23, 1
      %p130 = por %p128, %p129
      %p132 = scmp.ne.s32.totalorder %s117, %s131
      %p133 = scmp.eq.s32.totalorder %s23, 0
      %p134 = por %p132, %p133
      %s136 = sadd.s32 %s135, 1
      %p139 = scmp.eq.s32.totalorder %s17, 1
      %p140 = scmp.ne.s32.totalorder %s135, %s137
      %p141 = scmp.eq.s32.totalorder %s17, 0
      %p142 = por %p140, %p141
      %p143 = scmp.ne.s32.totalorder %s135, %s137
      %p144 = scmp.eq.s32.totalorder %s22, 1
      %p145 = por %p143, %p144
      %p146 = scmp.ne.s32.totalorder %s137, %s138
      %p147 = scmp.eq.s32.totalorder %s22, 0
      %p148 = por %p146, %p147
      %p149 = scmp.ne.s32.totalorder %s137, %s138
      %p150 = scmp.eq.s32.totalorder %s23, 1
      %p151 = por %p149, %p150
      %p153 = scmp.ne.s32.totalorder %s138, %s152
      %p154 = scmp.eq.s32.totalorder %s23, 0
      %p155 = por %p153, %p154
      %s156 = ssub.s32 %s17, %s24
      %p157 = scmp.eq.s32.totalorder %s156, 0
      %s159 = sadd.s32 %s158, 1
      %s160 = scalar_select %p157, %s158, %s159
      %p163 = pneg %p157
      %p164 = scmp.eq.s32.totalorder %s17, 1
      %p165 = por %p163, %p164
      %p166 = scmp.ne.s32.totalorder %s158, %s161
      %p167 = scmp.eq.s32.totalorder %s17, 0
      %p168 = por %p166, %p167
      %p169 = scmp.ne.s32.totalorder %s158, %s161
      %p170 = scmp.eq.s32.totalorder %s22, 1
      %p171 = por %p169, %p170
      %p172 = scmp.ne.s32.totalorder %s161, %s162
      %p173 = scmp.eq.s32.totalorder %s22, 0
      %p174 = por %p172, %p173
      %p175 = scmp.ne.s32.totalorder %s161, %s162
      %p176 = scmp.eq.s32.totalorder %s23, 1
      %p177 = por %p175, %p176
      %p179 = scmp.ne.s32.totalorder %s162, %s178
      %p180 = scmp.eq.s32.totalorder %s23, 0
      %p181 = por %p179, %p180
      %p182 = scmp.le.s32.totalorder 1, %s17
      %p183 = scmp.lt.s32.totalorder %s17, 3
      %p184 = pnand %p182, %p183
      %p185 = pneg %p184
      // Predicated region
      $region9: #{tpu_custom_call.1} parent=5 // pred_check
        _
      $region10: #{tpu_custom_call.1} parent=5 // pred_check_branch
        %187 = sbr.rel (%p184) target = $region12
      $region11: #{tpu_custom_call.1} parent=5 // pred_region
        %s188 = ssub.s32 %s17, 1
        // Predicated region
        $region13: #{tpu_custom_call.1} parent=11 // pred_check
          %p189 = pneg %p64
        $region14: #{tpu_custom_call.1} parent=11 // pred_check_branch
          %191 = sbr.rel (%p189) target = $region16
        $region15: #{tpu_custom_call.1} parent=11 // pred_region
          %193 = vsyncadd [#allocation3], 0
          %s194 = sshll.u32 %s1, 4
          %s195 = int_to_ptr.hbm [resolvable:$true] %s194
          %s196 = sshll.u32 [#allocation2], 4
          %s197 = int_to_ptr.vmem [resolvable:$true] %s196
          %202 = dma.hbm_to_vmem [thread:$0]  %s195, 2304, %s197, [#allocation3], 64, 64, 4
        $region16: #{tpu_custom_call.1} parent=11 // pred_fallthru
          _
        // Predicated region
        $region17: #{tpu_custom_call.1} parent=11 // pred_check
          %p203 = pneg %p85
        $region18: #{tpu_custom_call.1} parent=11 // pred_check_branch
          %205 = sbr.rel (%p203) target = $region20
        $region19: #{tpu_custom_call.1} parent=11 // pred_region
          _
        $region20: #{tpu_custom_call.1} parent=11 // pred_fallthru
          _
        // Predicated region
        $region21: #{tpu_custom_call.1} parent=11 // pred_check
          %p206 = pneg %p106
        $region22: #{tpu_custom_call.1} parent=11 // pred_check_branch
          %208 = sbr.rel (%p206) target = $region24
        $region23: #{tpu_custom_call.1} parent=11 // pred_region
          %210 = vsyncadd [#allocation6], 0
          %s211 = sshll.u32 %s3, 4
          %s212 = int_to_ptr.hbm [resolvable:$true] %s211
          %s213 = sshll.u32 [#allocation5], 4
          %s214 = int_to_ptr.vmem [resolvable:$true] %s213
          %219 = dma.hbm_to_vmem [thread:$0]  %s212, 2304, %s214, [#allocation6], 64, 64, 4
        $region24: #{tpu_custom_call.1} parent=11 // pred_fallthru
          _
        // Predicated region
        $region25: #{tpu_custom_call.1} parent=11 // pred_check
          %p220 = pneg %p127
        $region26: #{tpu_custom_call.1} parent=11 // pred_check_branch
          %222 = sbr.rel (%p220) target = $region28
        $region27: #{tpu_custom_call.1} parent=11 // pred_region
          _
        $region28: #{tpu_custom_call.1} parent=11 // pred_fallthru
          _
        // Predicated region
        $region29: #{tpu_custom_call.1} parent=11 // pred_check
          %p223 = pneg %p148
        $region30: #{tpu_custom_call.1} parent=11 // pred_check_branch
          %225 = sbr.rel (%p223) target = $region32
        $region31: #{tpu_custom_call.1} parent=11 // pred_region
          _
        $region32: #{tpu_custom_call.1} parent=11 // pred_fallthru
          _
      $region12: #{tpu_custom_call.1} parent=5 // pred_fallthru
        _
      %p226 = scmp.lt.s32.totalorder %s17, 2
      // Predicated region
      $region33: #{tpu_custom_call.1} parent=5 // pred_check
        %p227 = pneg %p226
      $region34: #{tpu_custom_call.1} parent=5 // pred_check_branch
        %229 = sbr.rel (%p227) target = $region36
      $region35: #{tpu_custom_call.1} parent=5 // pred_region
        // Predicated region
        $region37: #{tpu_custom_call.1} parent=35 // pred_check
          %p230 = pneg %p37
        $region38: #{tpu_custom_call.1} parent=35 // pred_check_branch
          %232 = sbr.rel (%p230) target = $region40
        $region39: #{tpu_custom_call.1} parent=35 // pred_region
          %s233 = smul.u32 8, %s17
          %p234 = scmp.lt.s32.totalorder %s233, 15
          %s235 = scalar_select %p234, %s233, 15
          %s236 = smul.addr %s235, 4
          %s237 = scalar_lea.vmem %s0, %s236
          %s238 = smul.u32 8, %s17
        $region40: #{tpu_custom_call.1} parent=35 // pred_fallthru
          _
      $region36: #{tpu_custom_call.1} parent=5 // pred_fallthru
        _
      %p239 = scmp.le.s32.totalorder 1, %s17
      %p240 = scmp.lt.s32.totalorder %s17, 3
      %p241 = pnand %p239, %p240
      %p242 = pneg %p241
      // Predicated region
      $region41: #{tpu_custom_call.1} parent=5 // pred_check
        _
      $region42: #{tpu_custom_call.1} parent=5 // pred_check_branch
        %244 = sbr.rel (%p241) target = $region44
      $region43: #{tpu_custom_call.1} parent=5 // pred_region
        %s245 = ssub.s32 %s17, 1
        // Predicated region
        $region45: #{tpu_custom_call.1} parent=43 // pred_check
          %p246 = pneg %p64
        $region46: #{tpu_custom_call.1} parent=43 // pred_check_branch
          %248 = sbr.rel (%p246) target = $region48
        $region47: #{tpu_custom_call.1} parent=43 // pred_region
          %250 = dma.done [#allocation3], 2304
        $region48: #{tpu_custom_call.1} parent=43 // pred_fallthru
          _
        // Predicated region
        $region49: #{tpu_custom_call.1} parent=43 // pred_check
          %p251 = pneg %p106
        $region50: #{tpu_custom_call.1} parent=43 // pred_check_branch
          %253 = sbr.rel (%p251) target = $region52
        $region51: #{tpu_custom_call.1} parent=43 // pred_region
          %255 = dma.done [#allocation6], 2304
        $region52: #{tpu_custom_call.1} parent=43 // pred_fallthru
          _
        %s256 = smul.u32 8, %s22
        %p257 = scmp.lt.s32.totalorder %s256, 15
        %s258 = scalar_select %p257, %s256, 15
        %s259 = smul.addr %s258, 4
        %s260 = scalar_lea.vmem %s0, %s259
        %p261 = pneg %p43
        %p262 = pneg %p40
        %p263 = pneg %p64
        %p264 = pneg %p61
        %p265 = pneg %p85
        %p266 = pneg %p82
        %p267 = pneg %p106
        %p268 = pneg %p103
        %p269 = pneg %p127
        %p270 = pneg %p124
        %p271 = pneg %p148
        %p272 = pneg %p145
        %p273 = pneg %p174
        %p274 = pneg %p171
        %s275 = sand.u32 %s161, 1
        %s276 = scalar_lea.sflag [#allocation4], %s275
        %s277 = sand.u32 %s161, 1
        %s278 = smul.addr %s277, 64
        %s279 = scalar_lea.vmem [#allocation7], %s278
        %s280 = smul.u32 8, %s22
        %p281 = scmp.lt.s32.totalorder %s280, 15
        %s282 = scalar_select %p281, %s280, 15
        %s283 = smul.addr %s282, 4
        %s284 = scalar_lea.vmem %s0, %s283
        %s285 = smul.u32 8, %s22
        %s286 = smul.u32 8, %s22
        %v288 = vlaneseq
        %v289 = vshrl.u32 %v288, 7
        %v290 = vadd.s32 %v289, 8
        %v291 = vadd.s32 %v289, 16
        %v292 = vadd.s32 %v289, 24
        %v293 = vadd.s32 %v289, 32
        %v294 = vadd.s32 %v289, 40
        %v295 = vadd.s32 %v289, 48
        %v296 = vadd.s32 %v289, 56
        %v297 = vand.u32 %v289, 7
        %v298 = vand.u32 %v290, 7
        %v299 = vand.u32 %v291, 7
        %v300 = vand.u32 %v292, 7
        %v301 = vand.u32 %v293, 7
        %v302 = vand.u32 %v294, 7
        %v303 = vand.u32 %v295, 7
        %v304 = vand.u32 %v296, 7
        %vm305 = vcmp.ge.s32.totalorder %v289, 8
        %vm306 = vcmp.ge.s32.totalorder %v290, 8
        %vm307 = vcmp.ge.s32.totalorder %v291, 8
        %vm308 = vcmp.ge.s32.totalorder %v292, 8
        %vm309 = vcmp.ge.s32.totalorder %v293, 8
        %vm310 = vcmp.ge.s32.totalorder %v294, 8
        %vm311 = vcmp.ge.s32.totalorder %v295, 8
        %vm312 = vcmp.ge.s32.totalorder %v296, 8
        %vm313 = vcmp.ge.s32.totalorder %v297, 1
        %vm314 = vcmp.ge.s32.totalorder %v298, 1
        %vm315 = vcmp.ge.s32.totalorder %v299, 1
        %vm316 = vcmp.ge.s32.totalorder %v300, 1
        %vm317 = vcmp.ge.s32.totalorder %v301, 1
        %vm318 = vcmp.ge.s32.totalorder %v302, 1
        %vm319 = vcmp.ge.s32.totalorder %v303, 1
        %vm320 = vcmp.ge.s32.totalorder %v304, 1
        %vm321 = vmand %vm305, %vm313
        %vm322 = vmand %vm306, %vm314
        %vm323 = vmand %vm307, %vm315
        %vm324 = vmand %vm308, %vm316
        %vm325 = vmand %vm309, %vm317
        %vm326 = vmand %vm310, %vm318
        %vm327 = vmand %vm311, %vm319
        %vm328 = vmand %vm312, %vm320
        %v329 = vsel %vm321, 1, 0
        %v330 = vsel %vm322, 1, 0
        %v331 = vsel %vm323, 1, 0
        %v332 = vsel %vm324, 1, 0
        %v333 = vsel %vm325, 1, 0
        %v334 = vsel %vm326, 1, 0
        %v335 = vsel %vm327, 1, 0
        %v336 = vsel %vm328, 1, 0
        %v337 = vcvt.s32.f32 %v329
        %v338 = vcvt.s32.f32 %v330
        %v339 = vcvt.s32.f32 %v331
        %v340 = vcvt.s32.f32 %v332
        %v341 = vcvt.s32.f32 %v333
        %v342 = vcvt.s32.f32 %v334
        %v343 = vcvt.s32.f32 %v335
        %v344 = vcvt.s32.f32 %v336
        %v345 = vsel %vm305, 1, 0
        %v346 = vsel %vm306, 1, 0
        %v347 = vsel %vm307, 1, 0
        %v348 = vsel %vm308, 1, 0
        %v349 = vsel %vm309, 1, 0
        %v350 = vsel %vm310, 1, 0
        %v351 = vsel %vm311, 1, 0
        %v352 = vsel %vm312, 1, 0
        %v353 = vcvt.s32.f32 %v345
        %v354 = vcvt.s32.f32 %v346
        %v355 = vcvt.s32.f32 %v347
        %v356 = vcvt.s32.f32 %v348
        %v357 = vcvt.s32.f32 %v349
        %v358 = vcvt.s32.f32 %v350
        %v359 = vcvt.s32.f32 %v351
        %v360 = vcvt.s32.f32 %v352
        %vm361 = vcmp.lt.s32.totalorder %v297, 7
        %vm362 = vcmp.lt.s32.totalorder %v298, 7
        %vm363 = vcmp.lt.s32.totalorder %v299, 7
        %vm364 = vcmp.lt.s32.totalorder %v300, 7
        %vm365 = vcmp.lt.s32.totalorder %v301, 7
        %vm366 = vcmp.lt.s32.totalorder %v302, 7
        %vm367 = vcmp.lt.s32.totalorder %v303, 7
        %vm368 = vcmp.lt.s32.totalorder %v304, 7
        %vm369 = vmand %vm305, %vm361
        %vm370 = vmand %vm306, %vm362
        %vm371 = vmand %vm307, %vm363
        %vm372 = vmand %vm308, %vm364
        %vm373 = vmand %vm309, %vm365
        %vm374 = vmand %vm310, %vm366
        %vm375 = vmand %vm311, %vm367
        %vm376 = vmand %vm312, %vm368
        %v377 = vsel %vm369, 1, 0
        %v378 = vsel %vm370, 1, 0
        %v379 = vsel %vm371, 1, 0
        %v380 = vsel %vm372, 1, 0
        %v381 = vsel %vm373, 1, 0
        %v382 = vsel %vm374, 1, 0
        %v383 = vsel %vm375, 1, 0
        %v384 = vsel %vm376, 1, 0
        %v385 = vcvt.s32.f32 %v377
        %v386 = vcvt.s32.f32 %v378
        %v387 = vcvt.s32.f32 %v379
        %v388 = vcvt.s32.f32 %v380
        %v389 = vcvt.s32.f32 %v381
        %v390 = vcvt.s32.f32 %v382
        %v391 = vcvt.s32.f32 %v383
        %v392 = vcvt.s32.f32 %v384
        %v393 = vsel %vm313, 1, 0
        %v394 = vsel %vm314, 1, 0
        %v395 = vsel %vm315, 1, 0
        %v396 = vsel %vm316, 1, 0
        %v397 = vsel %vm317, 1, 0
        %v398 = vsel %vm318, 1, 0
        %v399 = vsel %vm319, 1, 0
        %v400 = vsel %vm320, 1, 0
        %v401 = vcvt.s32.f32 %v393
        %v402 = vcvt.s32.f32 %v394
        %v403 = vcvt.s32.f32 %v395
        %v404 = vcvt.s32.f32 %v396
        %v405 = vcvt.s32.f32 %v397
        %v406 = vcvt.s32.f32 %v398
        %v407 = vcvt.s32.f32 %v399
        %v408 = vcvt.s32.f32 %v400
        %v409 = vsel %vm361, 1, 0
        %v410 = vsel %vm362, 1, 0
        %v411 = vsel %vm363, 1, 0
        %v412 = vsel %vm364, 1, 0
        %v413 = vsel %vm365, 1, 0
        %v414 = vsel %vm366, 1, 0
        %v415 = vsel %vm367, 1, 0
        %v416 = vsel %vm368, 1, 0
        %v417 = vcvt.s32.f32 %v409
        %v418 = vcvt.s32.f32 %v410
        %v419 = vcvt.s32.f32 %v411
        %v420 = vcvt.s32.f32 %v412
        %v421 = vcvt.s32.f32 %v413
        %v422 = vcvt.s32.f32 %v414
        %v423 = vcvt.s32.f32 %v415
        %v424 = vcvt.s32.f32 %v416
        %vm425 = vcmp.lt.s32.totalorder %v289, 56
        %vm426 = vcmp.lt.s32.totalorder %v290, 56
        %vm427 = vcmp.lt.s32.totalorder %v291, 56
        %vm428 = vcmp.lt.s32.totalorder %v292, 56
        %vm429 = vcmp.lt.s32.totalorder %v293, 56
        %vm430 = vcmp.lt.s32.totalorder %v294, 56
        %vm431 = vcmp.lt.s32.totalorder %v295, 56
        %vm432 = vcmp.lt.s32.totalorder %v296, 56
        %vm433 = vmand %vm425, %vm313
        %vm434 = vmand %vm426, %vm314
        %vm435 = vmand %vm427, %vm315
        %vm436 = vmand %vm428, %vm316
        %vm437 = vmand %vm429, %vm317
        %vm438 = vmand %vm430, %vm318
        %vm439 = vmand %vm431, %vm319
        %vm440 = vmand %vm432, %vm320
        %v441 = vsel %vm433, 1, 0
        %v442 = vsel %vm434, 1, 0
        %v443 = vsel %vm435, 1, 0
        %v444 = vsel %vm436, 1, 0
        %v445 = vsel %vm437, 1, 0
        %v446 = vsel %vm438, 1, 0
        %v447 = vsel %vm439, 1, 0
        %v448 = vsel %vm440, 1, 0
        %v449 = vcvt.s32.f32 %v441
        %v450 = vcvt.s32.f32 %v442
        %v451 = vcvt.s32.f32 %v443
        %v452 = vcvt.s32.f32 %v444
        %v453 = vcvt.s32.f32 %v445
        %v454 = vcvt.s32.f32 %v446
        %v455 = vcvt.s32.f32 %v447
        %v456 = vcvt.s32.f32 %v448
        %v457 = vsel %vm425, 1, 0
        %v458 = vsel %vm426, 1, 0
        %v459 = vsel %vm427, 1, 0
        %v460 = vsel %vm428, 1, 0
        %v461 = vsel %vm429, 1, 0
        %v462 = vsel %vm430, 1, 0
        %v463 = vsel %vm431, 1, 0
        %v464 = vsel %vm432, 1, 0
        %v465 = vcvt.s32.f32 %v457
        %v466 = vcvt.s32.f32 %v458
        %v467 = vcvt.s32.f32 %v459
        %v468 = vcvt.s32.f32 %v460
        %v469 = vcvt.s32.f32 %v461
        %v470 = vcvt.s32.f32 %v462
        %v471 = vcvt.s32.f32 %v463
        %v472 = vcvt.s32.f32 %v464
        %vm473 = vmand %vm425, %vm361
        %vm474 = vmand %vm426, %vm362
        %vm475 = vmand %vm427, %vm363
        %vm476 = vmand %vm428, %vm364
        %vm477 = vmand %vm429, %vm365
        %vm478 = vmand %vm430, %vm366
        %vm479 = vmand %vm431, %vm367
        %vm480 = vmand %vm432, %vm368
        %v481 = vsel %vm473, 1, 0
        %v482 = vsel %vm474, 1, 0
        %v483 = vsel %vm475, 1, 0
        %v484 = vsel %vm476, 1, 0
        %v485 = vsel %vm477, 1, 0
        %v486 = vsel %vm478, 1, 0
        %v487 = vsel %vm479, 1, 0
        %v488 = vsel %vm480, 1, 0
        %v489 = vcvt.s32.f32 %v481
        %v490 = vcvt.s32.f32 %v482
        %v491 = vcvt.s32.f32 %v483
        %v492 = vcvt.s32.f32 %v484
        %v493 = vcvt.s32.f32 %v485
        %v494 = vcvt.s32.f32 %v486
        %v495 = vcvt.s32.f32 %v487
        %v496 = vcvt.s32.f32 %v488
        %v497 = vld [vmem:[%s284] sm:$0xf]
        %v498 = vld [vmem:[%s284 + $0x4] sm:$0xf]
        %v499 = vld [vmem:[%s284 + $0x8] sm:$0xf]
        %v500 = vld [vmem:[%s284 + $0xc] sm:$0xf]
        %v501 = vld [vmem:[%s284 + $0x10] sm:$0xf]
        %v502 = vld [vmem:[%s284 + $0x14] sm:$0xf]
        %v503 = vld [vmem:[%s284 + $0x18] sm:$0xf]
        %v504 = vld [vmem:[%s284 + $0x1c] sm:$0xf]
        %v505 = vunpack.c.l.bf16 %v497
        %v506 = vunpack.c.l.bf16 %v498
        %v507 = vunpack.c.l.bf16 %v499
        %v508 = vunpack.c.l.bf16 %v500
        %v509 = vunpack.c.l.bf16 %v501
        %v510 = vunpack.c.l.bf16 %v502
        %v511 = vunpack.c.l.bf16 %v503
        %v512 = vunpack.c.l.bf16 %v504
        %v513 = vrot.slane %v505, 7
        %v514 = vrot.slane %v506, 7
        %v515 = vrot.slane %v507, 7
        %v516 = vrot.slane %v508, 7
        %v517 = vrot.slane %v509, 7
        %v518 = vrot.slane %v510, 7
        %v519 = vrot.slane %v511, 7
        %v520 = vrot.slane %v512, 7
        %vm521 = vcmp.lt.s32.totalorder %v289, 1
        %v522 = vsel %vm521, %v519, %v520
        %v523 = vsel %vm521, %v518, %v519
        %v524 = vsel %vm521, %v517, %v518
        %v525 = vsel %vm521, %v516, %v517
        %v526 = vsel %vm521, %v515, %v516
        %v527 = vsel %vm521, %v514, %v515
        %v528 = vsel %vm521, %v513, %v514
        %v529 = vsel %vm521, %v520, %v513
        %v530 = vmul.f32 %v522, %v337
        %v531 = vmul.f32 %v529, %v338
        %v532 = vmul.f32 %v528, %v339
        %v533 = vmul.f32 %v527, %v340
        %v534 = vmul.f32 %v526, %v341
        %v535 = vmul.f32 %v525, %v342
        %v536 = vmul.f32 %v524, %v343
        %v537 = vmul.f32 %v523, %v344
        %v538 = vpack.c.bf16 %v531, %v530
        %v539 = vpack.c.bf16 %v533, %v532
        %v540 = vpack.c.bf16 %v535, %v534
        %v541 = vpack.c.bf16 %v537, %v536
        %v542 = vld [vmem:[#allocation2] sm:$0xf]
        %v543 = vld [vmem:[#allocation2 + $0x4] sm:$0xf]
        %v544 = vld [vmem:[#allocation2 + $0x8] sm:$0xf]
        %v545 = vld [vmem:[#allocation2 + $0xc] sm:$0xf]
        %v546 = vmul.f32 %v512, %v353
        %v547 = vmul.f32 %v505, %v354
        %v548 = vmul.f32 %v506, %v355
        %v549 = vmul.f32 %v507, %v356
        %v550 = vmul.f32 %v508, %v357
        %v551 = vmul.f32 %v509, %v358
        %v552 = vmul.f32 %v510, %v359
        %v553 = vmul.f32 %v511, %v360
        %v554 = vpack.c.bf16 %v547, %v546
        %v555 = vpack.c.bf16 %v549, %v548
        %v556 = vpack.c.bf16 %v551, %v550
        %v557 = vpack.c.bf16 %v553, %v552
        %s558 = scalar_lea.vmem [#allocation2], 16
        %v559 = vld [vmem:[%s558] sm:$0xf]
        %v560 = vld [vmem:[%s558 + $0x4] sm:$0xf]
        %v561 = vld [vmem:[%s558 + $0x8] sm:$0xf]
        %v562 = vld [vmem:[%s558 + $0xc] sm:$0xf]
        %v567 = vunpack.c.l.b16 %v559
        %v568 = vunpack.c.l.b16 %v560
        %v569 = vunpack.c.l.b16 %v561
        %v570 = vunpack.c.l.b16 %v562
        %v571 = vpack.c.b16 %v568, %v567
        %v572 = vpack.c.b16 %v570, %v569
        %vm575 = vcmask 261120
        %v577 = vsel %vm575, %v554, 0
        %v580 = vsel %vm575, %v555, 0
        %v583 = vsel %vm575, %v556, 0
        %v586 = vsel %vm575, %v557, 0
        %588 = vmatpush.bf16.msra.mxu0 0
        %589 = vmatpush.bf16.msra.mxu0 0
        %590 = vmatpush.bf16.msra.mxu0 0
        %591 = vmatpush.bf16.msra.mxu0 0
        %592 = vmatpush.bf16.msra.mxu0 0
        %593 = vmatpush.bf16.msra.mxu0 0
        %594 = vmatpush.bf16.msra.mxu0 %v572
        %595 = vmatpush.bf16.msra.mxu0 %v571
        %596 = vmatmul.bf16.gmra.mxu0 %v577
        %v597 = vpop.f32.mrf.mxu0
        %v598 = vadd.f32 0.0, %v597
        %v599 = vpop.f32.mrf.mxu0
        %v600 = vadd.f32 0.0, %v599
        %601 = vmatmul.bf16.gmra.mxu0 %v580
        %v602 = vpop.f32.mrf.mxu0
        %v603 = vadd.f32 0.0, %v602
        %v604 = vpop.f32.mrf.mxu0
        %v605 = vadd.f32 0.0, %v604
        %606 = vmatmul.bf16.gmra.mxu0 %v583
        %v607 = vpop.f32.mrf.mxu0
        %v608 = vadd.f32 0.0, %v607
        %v609 = vpop.f32.mrf.mxu0
        %v610 = vadd.f32 0.0, %v609
        %611 = vmatmul.bf16.gmra.mxu0 %v586
        %v612 = vpop.f32.mrf.mxu0
        %v613 = vadd.f32 0.0, %v612
        %v614 = vpop.f32.mrf.mxu0
        %v615 = vadd.f32 0.0, %v614
        %616 = vdwg.mxu0
        %v621 = vunpack.c.l.b16 %v542
        %v622 = vunpack.c.l.b16 %v543
        %v623 = vunpack.c.l.b16 %v544
        %v624 = vunpack.c.l.b16 %v545
        %v625 = vpack.c.b16 %v622, %v621
        %v626 = vpack.c.b16 %v624, %v623
        %v630 = vsel %vm575, %v538, 0
        %v633 = vsel %vm575, %v539, 0
        %v636 = vsel %vm575, %v540, 0
        %v639 = vsel %vm575, %v541, 0
        %641 = vmatpush.bf16.msra.mxu0 0
        %642 = vmatpush.bf16.msra.mxu0 0
        %643 = vmatpush.bf16.msra.mxu0 0
        %644 = vmatpush.bf16.msra.mxu0 0
        %645 = vmatpush.bf16.msra.mxu0 0
        %646 = vmatpush.bf16.msra.mxu0 0
        %647 = vmatpush.bf16.msra.mxu0 %v626
        %648 = vmatpush.bf16.msra.mxu0 %v625
        %649 = vmatmul.bf16.gmra.mxu0 %v630
        %v650 = vpop.f32.mrf.mxu0
        %v651 = vadd.f32 %v598, %v650
        %v652 = vpop.f32.mrf.mxu0
        %v653 = vadd.f32 %v600, %v652
        %654 = vmatmul.bf16.gmra.mxu0 %v633
        %v655 = vpop.f32.mrf.mxu0
        %v656 = vadd.f32 %v603, %v655
        %v657 = vpop.f32.mrf.mxu0
        %v658 = vadd.f32 %v605, %v657
        %659 = vmatmul.bf16.gmra.mxu0 %v636
        %v660 = vpop.f32.mrf.mxu0
        %v661 = vadd.f32 %v608, %v660
        %v662 = vpop.f32.mrf.mxu0
        %v663 = vadd.f32 %v610, %v662
        %664 = vmatmul.bf16.gmra.mxu0 %v639
        %v665 = vpop.f32.mrf.mxu0
        %v666 = vadd.f32 %v613, %v665
        %v667 = vpop.f32.mrf.mxu0
        %v668 = vadd.f32 %v615, %v667
        %669 = vdwg.mxu0
        %v670 = vrot.slane %v505, 1
        %v671 = vrot.slane %v506, 1
        %v672 = vrot.slane %v507, 1
        %v673 = vrot.slane %v508, 1
        %v674 = vrot.slane %v509, 1
        %v675 = vrot.slane %v510, 1
        %v676 = vrot.slane %v511, 1
        %v677 = vrot.slane %v512, 1
        %vm678 = vcmp.lt.s32.totalorder %v289, 7
        %v679 = vsel %vm678, %v676, %v677
        %v680 = vsel %vm678, %v675, %v676
        %v681 = vsel %vm678, %v674, %v675
        %v682 = vsel %vm678, %v673, %v674
        %v683 = vsel %vm678, %v672, %v673
        %v684 = vsel %vm678, %v671, %v672
        %v685 = vsel %vm678, %v670, %v671
        %v686 = vsel %vm678, %v677, %v670
        %v687 = vmul.f32 %v686, %v385
        %v688 = vmul.f32 %v685, %v386
        %v689 = vmul.f32 %v684, %v387
        %v690 = vmul.f32 %v683, %v388
        %v691 = vmul.f32 %v682, %v389
        %v692 = vmul.f32 %v681, %v390
        %v693 = vmul.f32 %v680, %v391
        %v694 = vmul.f32 %v679, %v392
        %v695 = vpack.c.bf16 %v688, %v687
        %v696 = vpack.c.bf16 %v690, %v689
        %v697 = vpack.c.bf16 %v692, %v691
        %v698 = vpack.c.bf16 %v694, %v693
        %s699 = scalar_lea.vmem [#allocation2], 32
        %v700 = vld [vmem:[%s699] sm:$0xf]
        %v701 = vld [vmem:[%s699 + $0x4] sm:$0xf]
        %v702 = vld [vmem:[%s699 + $0x8] sm:$0xf]
        %v703 = vld [vmem:[%s699 + $0xc] sm:$0xf]
        %v708 = vunpack.c.l.b16 %v700
        %v709 = vunpack.c.l.b16 %v701
        %v710 = vunpack.c.l.b16 %v702
        %v711 = vunpack.c.l.b16 %v703
        %v712 = vpack.c.b16 %v709, %v708
        %v713 = vpack.c.b16 %v711, %v710
        %v717 = vsel %vm575, %v695, 0
        %v720 = vsel %vm575, %v696, 0
        %v723 = vsel %vm575, %v697, 0
        %v726 = vsel %vm575, %v698, 0
        %728 = vmatpush.bf16.msra.mxu0 0
        %729 = vmatpush.bf16.msra.mxu0 0
        %730 = vmatpush.bf16.msra.mxu0 0
        %731 = vmatpush.bf16.msra.mxu0 0
        %732 = vmatpush.bf16.msra.mxu0 0
        %733 = vmatpush.bf16.msra.mxu0 0
        %734 = vmatpush.bf16.msra.mxu0 %v713
        %735 = vmatpush.bf16.msra.mxu0 %v712
        %736 = vmatmul.bf16.gmra.mxu0 %v717
        %v737 = vpop.f32.mrf.mxu0
        %v738 = vadd.f32 0.0, %v737
        %v739 = vpop.f32.mrf.mxu0
        %v740 = vadd.f32 0.0, %v739
        %741 = vmatmul.bf16.gmra.mxu0 %v720
        %v742 = vpop.f32.mrf.mxu0
        %v743 = vadd.f32 0.0, %v742
        %v744 = vpop.f32.mrf.mxu0
        %v745 = vadd.f32 0.0, %v744
        %746 = vmatmul.bf16.gmra.mxu0 %v723
        %v747 = vpop.f32.mrf.mxu0
        %v748 = vadd.f32 0.0, %v747
        %v749 = vpop.f32.mrf.mxu0
        %v750 = vadd.f32 0.0, %v749
        %751 = vmatmul.bf16.gmra.mxu0 %v726
        %v752 = vpop.f32.mrf.mxu0
        %v753 = vadd.f32 0.0, %v752
        %v754 = vpop.f32.mrf.mxu0
        %v755 = vadd.f32 0.0, %v754
        %756 = vdwg.mxu0
        %v757 = vadd.f32 %v651, %v738
        %v758 = vadd.f32 %v653, %v740
        %v759 = vadd.f32 %v656, %v743
        %v760 = vadd.f32 %v658, %v745
        %v761 = vadd.f32 %v661, %v748
        %v762 = vadd.f32 %v663, %v750
        %v763 = vadd.f32 %v666, %v753
        %v764 = vadd.f32 %v668, %v755
        %v765 = vmul.f32 %v529, %v401
        %v766 = vmul.f32 %v528, %v402
        %v767 = vmul.f32 %v527, %v403
        %v768 = vmul.f32 %v526, %v404
        %v769 = vmul.f32 %v525, %v405
        %v770 = vmul.f32 %v524, %v406
        %v771 = vmul.f32 %v523, %v407
        %v772 = vmul.f32 %v522, %v408
        %v773 = vpack.c.bf16 %v766, %v765
        %v774 = vpack.c.bf16 %v768, %v767
        %v775 = vpack.c.bf16 %v770, %v769
        %v776 = vpack.c.bf16 %v772, %v771
        %s777 = scalar_lea.vmem [#allocation2], 48
        %v778 = vld [vmem:[%s777] sm:$0xf]
        %v779 = vld [vmem:[%s777 + $0x4] sm:$0xf]
        %v780 = vld [vmem:[%s777 + $0x8] sm:$0xf]
        %v781 = vld [vmem:[%s777 + $0xc] sm:$0xf]
        %v786 = vunpack.c.l.b16 %v778
        %v787 = vunpack.c.l.b16 %v779
        %v788 = vunpack.c.l.b16 %v780
        %v789 = vunpack.c.l.b16 %v781
        %v790 = vpack.c.b16 %v787, %v786
        %v791 = vpack.c.b16 %v789, %v788
        %v795 = vsel %vm575, %v773, 0
        %v798 = vsel %vm575, %v774, 0
        %v801 = vsel %vm575, %v775, 0
        %v804 = vsel %vm575, %v776, 0
        %806 = vmatpush.bf16.msra.mxu0 0
        %807 = vmatpush.bf16.msra.mxu0 0
        %808 = vmatpush.bf16.msra.mxu0 0
        %809 = vmatpush.bf16.msra.mxu0 0
        %810 = vmatpush.bf16.msra.mxu0 0
        %811 = vmatpush.bf16.msra.mxu0 0
        %812 = vmatpush.bf16.msra.mxu0 %v791
        %813 = vmatpush.bf16.msra.mxu0 %v790
        %814 = vmatmul.bf16.gmra.mxu0 %v795
        %v815 = vpop.f32.mrf.mxu0
        %v816 = vadd.f32 0.0, %v815
        %v817 = vpop.f32.mrf.mxu0
        %v818 = vadd.f32 0.0, %v817
        %819 = vmatmul.bf16.gmra.mxu0 %v798
        %v820 = vpop.f32.mrf.mxu0
        %v821 = vadd.f32 0.0, %v820
        %v822 = vpop.f32.mrf.mxu0
        %v823 = vadd.f32 0.0, %v822
        %824 = vmatmul.bf16.gmra.mxu0 %v801
        %v825 = vpop.f32.mrf.mxu0
        %v826 = vadd.f32 0.0, %v825
        %v827 = vpop.f32.mrf.mxu0
        %v828 = vadd.f32 0.0, %v827
        %829 = vmatmul.bf16.gmra.mxu0 %v804
        %v830 = vpop.f32.mrf.mxu0
        %v831 = vadd.f32 0.0, %v830
        %v832 = vpop.f32.mrf.mxu0
        %v833 = vadd.f32 0.0, %v832
        %834 = vdwg.mxu0
        %v835 = vadd.f32 %v757, %v816
        %v836 = vadd.f32 %v758, %v818
        %v837 = vadd.f32 %v759, %v821
        %v838 = vadd.f32 %v760, %v823
        %v839 = vadd.f32 %v761, %v826
        %v840 = vadd.f32 %v762, %v828
        %v841 = vadd.f32 %v763, %v831
        %v842 = vadd.f32 %v764, %v833
        %s843 = scalar_lea.vmem [#allocation2], 64
        %v844 = vld [vmem:[%s843] sm:$0xf]
        %v845 = vld [vmem:[%s843 + $0x4] sm:$0xf]
        %v846 = vld [vmem:[%s843 + $0x8] sm:$0xf]
        %v847 = vld [vmem:[%s843 + $0xc] sm:$0xf]
        %v856 = vunpack.c.l.b16 %v497
        %v857 = vunpack.c.l.b16 %v498
        %v858 = vunpack.c.l.b16 %v499
        %v859 = vunpack.c.l.b16 %v500
        %v860 = vunpack.c.l.b16 %v501
        %v861 = vunpack.c.l.b16 %v502
        %v862 = vunpack.c.l.b16 %v503
        %v863 = vunpack.c.l.b16 %v504
        %v864 = vpack.c.b16 %v857, %v856
        %v865 = vpack.c.b16 %v859, %v858
        %v866 = vpack.c.b16 %v861, %v860
        %v867 = vpack.c.b16 %v863, %v862
        %v872 = vunpack.c.l.b16 %v844
        %v873 = vunpack.c.l.b16 %v845
        %v874 = vunpack.c.l.b16 %v846
        %v875 = vunpack.c.l.b16 %v847
        %v876 = vpack.c.b16 %v873, %v872
        %v877 = vpack.c.b16 %v875, %v874
        %v881 = vsel %vm575, %v864, 0
        %v884 = vsel %vm575, %v865, 0
        %v887 = vsel %vm575, %v866, 0
        %v890 = vsel %vm575, %v867, 0
        %892 = vmatpush.bf16.msra.mxu0 0
        %893 = vmatpush.bf16.msra.mxu0 0
        %894 = vmatpush.bf16.msra.mxu0 0
        %895 = vmatpush.bf16.msra.mxu0 0
        %896 = vmatpush.bf16.msra.mxu0 0
        %897 = vmatpush.bf16.msra.mxu0 0
        %898 = vmatpush.bf16.msra.mxu0 %v877
        %899 = vmatpush.bf16.msra.mxu0 %v876
        %900 = vmatmul.bf16.gmra.mxu0 %v881
        %v901 = vpop.f32.mrf.mxu0
        %v902 = vadd.f32 0.0, %v901
        %v903 = vpop.f32.mrf.mxu0
        %v904 = vadd.f32 0.0, %v903
        %905 = vmatmul.bf16.gmra.mxu0 %v884
        %v906 = vpop.f32.mrf.mxu0
        %v907 = vadd.f32 0.0, %v906
        %v908 = vpop.f32.mrf.mxu0
        %v909 = vadd.f32 0.0, %v908
        %910 = vmatmul.bf16.gmra.mxu0 %v887
        %v911 = vpop.f32.mrf.mxu0
        %v912 = vadd.f32 0.0, %v911
        %v913 = vpop.f32.mrf.mxu0
        %v914 = vadd.f32 0.0, %v913
        %915 = vmatmul.bf16.gmra.mxu0 %v890
        %v916 = vpop.f32.mrf.mxu0
        %v917 = vadd.f32 0.0, %v916
        %v918 = vpop.f32.mrf.mxu0
        %v919 = vadd.f32 0.0, %v918
        %920 = vdwg.mxu0
        %v921 = vadd.f32 %v835, %v902
        %v922 = vadd.f32 %v836, %v904
        %v923 = vadd.f32 %v837, %v907
        %v924 = vadd.f32 %v838, %v909
        %v925 = vadd.f32 %v839, %v912
        %v926 = vadd.f32 %v840, %v914
        %v927 = vadd.f32 %v841, %v917
        %v928 = vadd.f32 %v842, %v919
        %v929 = vmul.f32 %v685, %v417
        %v930 = vmul.f32 %v684, %v418
        %v931 = vmul.f32 %v683, %v419
        %v932 = vmul.f32 %v682, %v420
        %v933 = vmul.f32 %v681, %v421
        %v934 = vmul.f32 %v680, %v422
        %v935 = vmul.f32 %v679, %v423
        %v936 = vmul.f32 %v686, %v424
        %v937 = vpack.c.bf16 %v930, %v929
        %v938 = vpack.c.bf16 %v932, %v931
        %v939 = vpack.c.bf16 %v934, %v933
        %v940 = vpack.c.bf16 %v936, %v935
        %s941 = scalar_lea.vmem [#allocation2], 80
        %v942 = vld [vmem:[%s941] sm:$0xf]
        %v943 = vld [vmem:[%s941 + $0x4] sm:$0xf]
        %v944 = vld [vmem:[%s941 + $0x8] sm:$0xf]
        %v945 = vld [vmem:[%s941 + $0xc] sm:$0xf]
        %v950 = vunpack.c.l.b16 %v942
        %v951 = vunpack.c.l.b16 %v943
        %v952 = vunpack.c.l.b16 %v944
        %v953 = vunpack.c.l.b16 %v945
        %v954 = vpack.c.b16 %v951, %v950
        %v955 = vpack.c.b16 %v953, %v952
        %v959 = vsel %vm575, %v937, 0
        %v962 = vsel %vm575, %v938, 0
        %v965 = vsel %vm575, %v939, 0
        %v968 = vsel %vm575, %v940, 0
        %970 = vmatpush.bf16.msra.mxu0 0
        %971 = vmatpush.bf16.msra.mxu0 0
        %972 = vmatpush.bf16.msra.mxu0 0
        %973 = vmatpush.bf16.msra.mxu0 0
        %974 = vmatpush.bf16.msra.mxu0 0
        %975 = vmatpush.bf16.msra.mxu0 0
        %976 = vmatpush.bf16.msra.mxu0 %v955
        %977 = vmatpush.bf16.msra.mxu0 %v954
        %978 = vmatmul.bf16.gmra.mxu0 %v959
        %v979 = vpop.f32.mrf.mxu0
        %v980 = vadd.f32 0.0, %v979
        %v981 = vpop.f32.mrf.mxu0
        %v982 = vadd.f32 0.0, %v981
        %983 = vmatmul.bf16.gmra.mxu0 %v962
        %v984 = vpop.f32.mrf.mxu0
        %v985 = vadd.f32 0.0, %v984
        %v986 = vpop.f32.mrf.mxu0
        %v987 = vadd.f32 0.0, %v986
        %988 = vmatmul.bf16.gmra.mxu0 %v965
        %v989 = vpop.f32.mrf.mxu0
        %v990 = vadd.f32 0.0, %v989
        %v991 = vpop.f32.mrf.mxu0
        %v992 = vadd.f32 0.0, %v991
        %993 = vmatmul.bf16.gmra.mxu0 %v968
        %v994 = vpop.f32.mrf.mxu0
        %v995 = vadd.f32 0.0, %v994
        %v996 = vpop.f32.mrf.mxu0
        %v997 = vadd.f32 0.0, %v996
        %998 = vdwg.mxu0
        %v999 = vadd.f32 %v921, %v980
        %v1000 = vadd.f32 %v922, %v982
        %v1001 = vadd.f32 %v923, %v985
        %v1002 = vadd.f32 %v924, %v987
        %v1003 = vadd.f32 %v925, %v990
        %v1004 = vadd.f32 %v926, %v992
        %v1005 = vadd.f32 %v927, %v995
        %v1006 = vadd.f32 %v928, %v997
        %v1007 = vmul.f32 %v528, %v449
        %v1008 = vmul.f32 %v527, %v450
        %v1009 = vmul.f32 %v526, %v451
        %v1010 = vmul.f32 %v525, %v452
        %v1011 = vmul.f32 %v524, %v453
        %v1012 = vmul.f32 %v523, %v454
        %v1013 = vmul.f32 %v522, %v455
        %v1014 = vmul.f32 %v529, %v456
        %v1015 = vpack.c.bf16 %v1008, %v1007
        %v1016 = vpack.c.bf16 %v1010, %v1009
        %v1017 = vpack.c.bf16 %v1012, %v1011
        %v1018 = vpack.c.bf16 %v1014, %v1013
        %s1019 = scalar_lea.vmem [#allocation2], 96
        %v1020 = vld [vmem:[%s1019] sm:$0xf]
        %v1021 = vld [vmem:[%s1019 + $0x4] sm:$0xf]
        %v1022 = vld [vmem:[%s1019 + $0x8] sm:$0xf]
        %v1023 = vld [vmem:[%s1019 + $0xc] sm:$0xf]
        %v1028 = vunpack.c.l.b16 %v1020
        %v1029 = vunpack.c.l.b16 %v1021
        %v1030 = vunpack.c.l.b16 %v1022
        %v1031 = vunpack.c.l.b16 %v1023
        %v1032 = vpack.c.b16 %v1029, %v1028
        %v1033 = vpack.c.b16 %v1031, %v1030
        %v1037 = vsel %vm575, %v1015, 0
        %v1040 = vsel %vm575, %v1016, 0
        %v1043 = vsel %vm575, %v1017, 0
        %v1046 = vsel %vm575, %v1018, 0
        %1048 = vmatpush.bf16.msra.mxu0 0
        %1049 = vmatpush.bf16.msra.mxu0 0
        %1050 = vmatpush.bf16.msra.mxu0 0
        %1051 = vmatpush.bf16.msra.mxu0 0
        %1052 = vmatpush.bf16.msra.mxu0 0
        %1053 = vmatpush.bf16.msra.mxu0 0
        %1054 = vmatpush.bf16.msra.mxu0 %v1033
        %1055 = vmatpush.bf16.msra.mxu0 %v1032
        %1056 = vmatmul.bf16.gmra.mxu0 %v1037
        %v1057 = vpop.f32.mrf.mxu0
        %v1058 = vadd.f32 0.0, %v1057
        %v1059 = vpop.f32.mrf.mxu0
        %v1060 = vadd.f32 0.0, %v1059
        %1061 = vmatmul.bf16.gmra.mxu0 %v1040
        %v1062 = vpop.f32.mrf.mxu0
        %v1063 = vadd.f32 0.0, %v1062
        %v1064 = vpop.f32.mrf.mxu0
        %v1065 = vadd.f32 0.0, %v1064
        %1066 = vmatmul.bf16.gmra.mxu0 %v1043
        %v1067 = vpop.f32.mrf.mxu0
        %v1068 = vadd.f32 0.0, %v1067
        %v1069 = vpop.f32.mrf.mxu0
        %v1070 = vadd.f32 0.0, %v1069
        %1071 = vmatmul.bf16.gmra.mxu0 %v1046
        %v1072 = vpop.f32.mrf.mxu0
        %v1073 = vadd.f32 0.0, %v1072
        %v1074 = vpop.f32.mrf.mxu0
        %v1075 = vadd.f32 0.0, %v1074
        %1076 = vdwg.mxu0
        %v1077 = vadd.f32 %v999, %v1058
        %v1078 = vadd.f32 %v1000, %v1060
        %v1079 = vadd.f32 %v1001, %v1063
        %v1080 = vadd.f32 %v1002, %v1065
        %v1081 = vadd.f32 %v1003, %v1068
        %v1082 = vadd.f32 %v1004, %v1070
        %v1083 = vadd.f32 %v1005, %v1073
        %v1084 = vadd.f32 %v1006, %v1075
        %v1085 = vmul.f32 %v506, %v465
        %v1086 = vmul.f32 %v507, %v466
        %v1087 = vmul.f32 %v508, %v467
        %v1088 = vmul.f32 %v509, %v468
        %v1089 = vmul.f32 %v510, %v469
        %v1090 = vmul.f32 %v511, %v470
        %v1091 = vmul.f32 %v512, %v471
        %v1092 = vmul.f32 %v505, %v472
        %v1093 = vpack.c.bf16 %v1086, %v1085
        %v1094 = vpack.c.bf16 %v1088, %v1087
        %v1095 = vpack.c.bf16 %v1090, %v1089
        %v1096 = vpack.c.bf16 %v1092, %v1091
        %s1097 = scalar_lea.vmem [#allocation2], 112
        %v1098 = vld [vmem:[%s1097] sm:$0xf]
        %v1099 = vld [vmem:[%s1097 + $0x4] sm:$0xf]
        %v1100 = vld [vmem:[%s1097 + $0x8] sm:$0xf]
        %v1101 = vld [vmem:[%s1097 + $0xc] sm:$0xf]
        %v1106 = vunpack.c.l.b16 %v1098
        %v1107 = vunpack.c.l.b16 %v1099
        %v1108 = vunpack.c.l.b16 %v1100
        %v1109 = vunpack.c.l.b16 %v1101
        %v1110 = vpack.c.b16 %v1107, %v1106
        %v1111 = vpack.c.b16 %v1109, %v1108
        %v1115 = vsel %vm575, %v1093, 0
        %v1118 = vsel %vm575, %v1094, 0
        %v1121 = vsel %vm575, %v1095, 0
        %v1124 = vsel %vm575, %v1096, 0
        %1126 = vmatpush.bf16.msra.mxu0 0
        %1127 = vmatpush.bf16.msra.mxu0 0
        %1128 = vmatpush.bf16.msra.mxu0 0
        %1129 = vmatpush.bf16.msra.mxu0 0
        %1130 = vmatpush.bf16.msra.mxu0 0
        %1131 = vmatpush.bf16.msra.mxu0 0
        %1132 = vmatpush.bf16.msra.mxu0 %v1111
        %1133 = vmatpush.bf16.msra.mxu0 %v1110
        %1134 = vmatmul.bf16.gmra.mxu0 %v1115
        %v1135 = vpop.f32.mrf.mxu0
        %v1136 = vadd.f32 0.0, %v1135
        %v1137 = vpop.f32.mrf.mxu0
        %v1138 = vadd.f32 0.0, %v1137
        %1139 = vmatmul.bf16.gmra.mxu0 %v1118
        %v1140 = vpop.f32.mrf.mxu0
        %v1141 = vadd.f32 0.0, %v1140
        %v1142 = vpop.f32.mrf.mxu0
        %v1143 = vadd.f32 0.0, %v1142
        %1144 = vmatmul.bf16.gmra.mxu0 %v1121
        %v1145 = vpop.f32.mrf.mxu0
        %v1146 = vadd.f32 0.0, %v1145
        %v1147 = vpop.f32.mrf.mxu0
        %v1148 = vadd.f32 0.0, %v1147
        %1149 = vmatmul.bf16.gmra.mxu0 %v1124
        %v1150 = vpop.f32.mrf.mxu0
        %v1151 = vadd.f32 0.0, %v1150
        %v1152 = vpop.f32.mrf.mxu0
        %v1153 = vadd.f32 0.0, %v1152
        %1154 = vdwg.mxu0
        %v1155 = vadd.f32 %v1077, %v1136
        %v1156 = vadd.f32 %v1078, %v1138
        %v1157 = vadd.f32 %v1079, %v1141
        %v1158 = vadd.f32 %v1080, %v1143
        %v1159 = vadd.f32 %v1081, %v1146
        %v1160 = vadd.f32 %v1082, %v1148
        %v1161 = vadd.f32 %v1083, %v1151
        %v1162 = vadd.f32 %v1084, %v1153
        %v1163 = vmul.f32 %v684, %v489
        %v1164 = vmul.f32 %v683, %v490
        %v1165 = vmul.f32 %v682, %v491
        %v1166 = vmul.f32 %v681, %v492
        %v1167 = vmul.f32 %v680, %v493
        %v1168 = vmul.f32 %v679, %v494
        %v1169 = vmul.f32 %v686, %v495
        %v1170 = vmul.f32 %v685, %v496
        %v1171 = vpack.c.bf16 %v1164, %v1163
        %v1172 = vpack.c.bf16 %v1166, %v1165
        %v1173 = vpack.c.bf16 %v1168, %v1167
        %v1174 = vpack.c.bf16 %v1170, %v1169
        %s1175 = scalar_lea.vmem [#allocation2], 128
        %v1176 = vld [vmem:[%s1175] sm:$0xf]
        %v1177 = vld [vmem:[%s1175 + $0x4] sm:$0xf]
        %v1178 = vld [vmem:[%s1175 + $0x8] sm:$0xf]
        %v1179 = vld [vmem:[%s1175 + $0xc] sm:$0xf]
        %v1184 = vunpack.c.l.b16 %v1176
        %v1185 = vunpack.c.l.b16 %v1177
        %v1186 = vunpack.c.l.b16 %v1178
        %v1187 = vunpack.c.l.b16 %v1179
        %v1188 = vpack.c.b16 %v1185, %v1184
        %v1189 = vpack.c.b16 %v1187, %v1186
        %v1193 = vsel %vm575, %v1171, 0
        %v1196 = vsel %vm575, %v1172, 0
        %v1199 = vsel %vm575, %v1173, 0
        %v1202 = vsel %vm575, %v1174, 0
        %1204 = vmatpush.bf16.msra.mxu0 0
        %1205 = vmatpush.bf16.msra.mxu0 0
        %1206 = vmatpush.bf16.msra.mxu0 0
        %1207 = vmatpush.bf16.msra.mxu0 0
        %1208 = vmatpush.bf16.msra.mxu0 0
        %1209 = vmatpush.bf16.msra.mxu0 0
        %1210 = vmatpush.bf16.msra.mxu0 %v1189
        %1211 = vmatpush.bf16.msra.mxu0 %v1188
        %1212 = vmatmul.bf16.gmra.mxu0 %v1193
        %v1213 = vpop.f32.mrf.mxu0
        %v1214 = vadd.f32 0.0, %v1213
        %v1215 = vpop.f32.mrf.mxu0
        %v1216 = vadd.f32 0.0, %v1215
        %1217 = vmatmul.bf16.gmra.mxu0 %v1196
        %v1218 = vpop.f32.mrf.mxu0
        %v1219 = vadd.f32 0.0, %v1218
        %v1220 = vpop.f32.mrf.mxu0
        %v1221 = vadd.f32 0.0, %v1220
        %1222 = vmatmul.bf16.gmra.mxu0 %v1199
        %v1223 = vpop.f32.mrf.mxu0
        %v1224 = vadd.f32 0.0, %v1223
        %v1225 = vpop.f32.mrf.mxu0
        %v1226 = vadd.f32 0.0, %v1225
        %1227 = vmatmul.bf16.gmra.mxu0 %v1202
        %v1228 = vpop.f32.mrf.mxu0
        %v1229 = vadd.f32 0.0, %v1228
        %v1230 = vpop.f32.mrf.mxu0
        %v1231 = vadd.f32 0.0, %v1230
        %1232 = vdwg.mxu0
        %v1233 = vadd.f32 %v1155, %v1214
        %v1234 = vadd.f32 %v1156, %v1216
        %v1235 = vadd.f32 %v1157, %v1219
        %v1236 = vadd.f32 %v1158, %v1221
        %v1237 = vadd.f32 %v1159, %v1224
        %v1238 = vadd.f32 %v1160, %v1226
        %v1239 = vadd.f32 %v1161, %v1229
        %v1240 = vadd.f32 %v1162, %v1231
        %v1241 = vld [vmem:[%s2] sm:$0x1]
        %v1243 = vperm.slane %v1241, 0
        %v1245 = vadd.f32 %v1233, %v1243
        %v1246 = vadd.f32 %v1234, %v1243
        %v1247 = vadd.f32 %v1235, %v1243
        %v1248 = vadd.f32 %v1236, %v1243
        %v1249 = vadd.f32 %v1237, %v1243
        %v1250 = vadd.f32 %v1238, %v1243
        %v1251 = vadd.f32 %v1239, %v1243
        %v1252 = vadd.f32 %v1240, %v1243
        %v1253 = vmax.f32 %v1245, 0.0
        %v1254 = vmax.f32 %v1246, 0.0
        %v1255 = vmax.f32 %v1247, 0.0
        %v1256 = vmax.f32 %v1248, 0.0
        %v1257 = vmax.f32 %v1249, 0.0
        %v1258 = vmax.f32 %v1250, 0.0
        %v1259 = vmax.f32 %v1251, 0.0
        %v1260 = vmax.f32 %v1252, 0.0
        %v1261 = vrot.slane %v1253, 7
        %v1262 = vrot.slane %v1254, 7
        %v1263 = vrot.slane %v1255, 7
        %v1264 = vrot.slane %v1256, 7
        %v1265 = vrot.slane %v1257, 7
        %v1266 = vrot.slane %v1258, 7
        %v1267 = vrot.slane %v1259, 7
        %v1268 = vrot.slane %v1260, 7
        %v1269 = vsel %vm521, %v1267, %v1268
        %v1270 = vsel %vm521, %v1266, %v1267
        %v1271 = vsel %vm521, %v1265, %v1266
        %v1272 = vsel %vm521, %v1264, %v1265
        %v1273 = vsel %vm521, %v1263, %v1264
        %v1274 = vsel %vm521, %v1262, %v1263
        %v1275 = vsel %vm521, %v1261, %v1262
        %v1276 = vsel %vm521, %v1268, %v1261
        %v1277 = vmul.f32 %v1269, %v337
        %v1278 = vmul.f32 %v1276, %v338
        %v1279 = vmul.f32 %v1275, %v339
        %v1280 = vmul.f32 %v1274, %v340
        %v1281 = vmul.f32 %v1273, %v341
        %v1282 = vmul.f32 %v1272, %v342
        %v1283 = vmul.f32 %v1271, %v343
        %v1284 = vmul.f32 %v1270, %v344
        %v1285 = vpack.c.bf16 %v1278, %v1277
        %v1286 = vpack.c.bf16 %v1280, %v1279
        %v1287 = vpack.c.bf16 %v1282, %v1281
        %v1288 = vpack.c.bf16 %v1284, %v1283
        %v1289 = vld [vmem:[#allocation5] sm:$0xf]
        %v1290 = vld [vmem:[#allocation5 + $0x4] sm:$0xf]
        %v1291 = vld [vmem:[#allocation5 + $0x8] sm:$0xf]
        %v1292 = vld [vmem:[#allocation5 + $0xc] sm:$0xf]
        %v1293 = vmul.f32 %v1260, %v353
        %v1294 = vmul.f32 %v1253, %v354
        %v1295 = vmul.f32 %v1254, %v355
        %v1296 = vmul.f32 %v1255, %v356
        %v1297 = vmul.f32 %v1256, %v357
        %v1298 = vmul.f32 %v1257, %v358
        %v1299 = vmul.f32 %v1258, %v359
        %v1300 = vmul.f32 %v1259, %v360
        %v1301 = vpack.c.bf16 %v1294, %v1293
        %v1302 = vpack.c.bf16 %v1296, %v1295
        %v1303 = vpack.c.bf16 %v1298, %v1297
        %v1304 = vpack.c.bf16 %v1300, %v1299
        %s1305 = scalar_lea.vmem [#allocation5], 16
        %v1306 = vld [vmem:[%s1305] sm:$0xf]
        %v1307 = vld [vmem:[%s1305 + $0x4] sm:$0xf]
        %v1308 = vld [vmem:[%s1305 + $0x8] sm:$0xf]
        %v1309 = vld [vmem:[%s1305 + $0xc] sm:$0xf]
        %v1314 = vunpack.c.l.b16 %v1306
        %v1315 = vunpack.c.l.b16 %v1307
        %v1316 = vunpack.c.l.b16 %v1308
        %v1317 = vunpack.c.l.b16 %v1309
        %v1318 = vpack.c.b16 %v1315, %v1314
        %v1319 = vpack.c.b16 %v1317, %v1316
        %v1323 = vsel %vm575, %v1301, 0
        %v1326 = vsel %vm575, %v1302, 0
        %v1329 = vsel %vm575, %v1303, 0
        %v1332 = vsel %vm575, %v1304, 0
        %1334 = vmatpush.bf16.msra.mxu0 0
        %1335 = vmatpush.bf16.msra.mxu0 0
        %1336 = vmatpush.bf16.msra.mxu0 0
        %1337 = vmatpush.bf16.msra.mxu0 0
        %1338 = vmatpush.bf16.msra.mxu0 0
        %1339 = vmatpush.bf16.msra.mxu0 0
        %1340 = vmatpush.bf16.msra.mxu0 %v1319
        %1341 = vmatpush.bf16.msra.mxu0 %v1318
        %1342 = vmatmul.bf16.gmra.mxu0 %v1323
        %v1343 = vpop.f32.mrf.mxu0
        %v1344 = vadd.f32 0.0, %v1343
        %v1345 = vpop.f32.mrf.mxu0
        %v1346 = vadd.f32 0.0, %v1345
        %1347 = vmatmul.bf16.gmra.mxu0 %v1326
        %v1348 = vpop.f32.mrf.mxu0
        %v1349 = vadd.f32 0.0, %v1348
        %v1350 = vpop.f32.mrf.mxu0
        %v1351 = vadd.f32 0.0, %v1350
        %1352 = vmatmul.bf16.gmra.mxu0 %v1329
        %v1353 = vpop.f32.mrf.mxu0
        %v1354 = vadd.f32 0.0, %v1353
        %v1355 = vpop.f32.mrf.mxu0
        %v1356 = vadd.f32 0.0, %v1355
        %1357 = vmatmul.bf16.gmra.mxu0 %v1332
        %v1358 = vpop.f32.mrf.mxu0
        %v1359 = vadd.f32 0.0, %v1358
        %v1360 = vpop.f32.mrf.mxu0
        %v1361 = vadd.f32 0.0, %v1360
        %1362 = vdwg.mxu0
        %v1367 = vunpack.c.l.b16 %v1289
        %v1368 = vunpack.c.l.b16 %v1290
        %v1369 = vunpack.c.l.b16 %v1291
        %v1370 = vunpack.c.l.b16 %v1292
        %v1371 = vpack.c.b16 %v1368, %v1367
        %v1372 = vpack.c.b16 %v1370, %v1369
        %v1376 = vsel %vm575, %v1285, 0
        %v1379 = vsel %vm575, %v1286, 0
        %v1382 = vsel %vm575, %v1287, 0
        %v1385 = vsel %vm575, %v1288, 0
        %1387 = vmatpush.bf16.msra.mxu0 0
        %1388 = vmatpush.bf16.msra.mxu0 0
        %1389 = vmatpush.bf16.msra.mxu0 0
        %1390 = vmatpush.bf16.msra.mxu0 0
        %1391 = vmatpush.bf16.msra.mxu0 0
        %1392 = vmatpush.bf16.msra.mxu0 0
        %1393 = vmatpush.bf16.msra.mxu0 %v1372
        %1394 = vmatpush.bf16.msra.mxu0 %v1371
        %1395 = vmatmul.bf16.gmra.mxu0 %v1376
        %v1396 = vpop.f32.mrf.mxu0
        %v1397 = vadd.f32 %v1344, %v1396
        %v1398 = vpop.f32.mrf.mxu0
        %v1399 = vadd.f32 %v1346, %v1398
        %1400 = vmatmul.bf16.gmra.mxu0 %v1379
        %v1401 = vpop.f32.mrf.mxu0
        %v1402 = vadd.f32 %v1349, %v1401
        %v1403 = vpop.f32.mrf.mxu0
        %v1404 = vadd.f32 %v1351, %v1403
        %1405 = vmatmul.bf16.gmra.mxu0 %v1382
        %v1406 = vpop.f32.mrf.mxu0
        %v1407 = vadd.f32 %v1354, %v1406
        %v1408 = vpop.f32.mrf.mxu0
        %v1409 = vadd.f32 %v1356, %v1408
        %1410 = vmatmul.bf16.gmra.mxu0 %v1385
        %v1411 = vpop.f32.mrf.mxu0
        %v1412 = vadd.f32 %v1359, %v1411
        %v1413 = vpop.f32.mrf.mxu0
        %v1414 = vadd.f32 %v1361, %v1413
        %1415 = vdwg.mxu0
        %v1416 = vrot.slane %v1253, 1
        %v1417 = vrot.slane %v1254, 1
        %v1418 = vrot.slane %v1255, 1
        %v1419 = vrot.slane %v1256, 1
        %v1420 = vrot.slane %v1257, 1
        %v1421 = vrot.slane %v1258, 1
        %v1422 = vrot.slane %v1259, 1
        %v1423 = vrot.slane %v1260, 1
        %v1424 = vsel %vm678, %v1422, %v1423
        %v1425 = vsel %vm678, %v1421, %v1422
        %v1426 = vsel %vm678, %v1420, %v1421
        %v1427 = vsel %vm678, %v1419, %v1420
        %v1428 = vsel %vm678, %v1418, %v1419
        %v1429 = vsel %vm678, %v1417, %v1418
        %v1430 = vsel %vm678, %v1416, %v1417
        %v1431 = vsel %vm678, %v1423, %v1416
        %v1432 = vmul.f32 %v1431, %v385
        %v1433 = vmul.f32 %v1430, %v386
        %v1434 = vmul.f32 %v1429, %v387
        %v1435 = vmul.f32 %v1428, %v388
        %v1436 = vmul.f32 %v1427, %v389
        %v1437 = vmul.f32 %v1426, %v390
        %v1438 = vmul.f32 %v1425, %v391
        %v1439 = vmul.f32 %v1424, %v392
        %v1440 = vpack.c.bf16 %v1433, %v1432
        %v1441 = vpack.c.bf16 %v1435, %v1434
        %v1442 = vpack.c.bf16 %v1437, %v1436
        %v1443 = vpack.c.bf16 %v1439, %v1438
        %s1444 = scalar_lea.vmem [#allocation5], 32
        %v1445 = vld [vmem:[%s1444] sm:$0xf]
        %v1446 = vld [vmem:[%s1444 + $0x4] sm:$0xf]
        %v1447 = vld [vmem:[%s1444 + $0x8] sm:$0xf]
        %v1448 = vld [vmem:[%s1444 + $0xc] sm:$0xf]
        %v1453 = vunpack.c.l.b16 %v1445
        %v1454 = vunpack.c.l.b16 %v1446
        %v1455 = vunpack.c.l.b16 %v1447
        %v1456 = vunpack.c.l.b16 %v1448
        %v1457 = vpack.c.b16 %v1454, %v1453
        %v1458 = vpack.c.b16 %v1456, %v1455
        %v1462 = vsel %vm575, %v1440, 0
        %v1465 = vsel %vm575, %v1441, 0
        %v1468 = vsel %vm575, %v1442, 0
        %v1471 = vsel %vm575, %v1443, 0
        %1473 = vmatpush.bf16.msra.mxu0 0
        %1474 = vmatpush.bf16.msra.mxu0 0
        %1475 = vmatpush.bf16.msra.mxu0 0
        %1476 = vmatpush.bf16.msra.mxu0 0
        %1477 = vmatpush.bf16.msra.mxu0 0
        %1478 = vmatpush.bf16.msra.mxu0 0
        %1479 = vmatpush.bf16.msra.mxu0 %v1458
        %1480 = vmatpush.bf16.msra.mxu0 %v1457
        %1481 = vmatmul.bf16.gmra.mxu0 %v1462
        %v1482 = vpop.f32.mrf.mxu0
        %v1483 = vadd.f32 0.0, %v1482
        %v1484 = vpop.f32.mrf.mxu0
        %v1485 = vadd.f32 0.0, %v1484
        %1486 = vmatmul.bf16.gmra.mxu0 %v1465
        %v1487 = vpop.f32.mrf.mxu0
        %v1488 = vadd.f32 0.0, %v1487
        %v1489 = vpop.f32.mrf.mxu0
        %v1490 = vadd.f32 0.0, %v1489
        %1491 = vmatmul.bf16.gmra.mxu0 %v1468
        %v1492 = vpop.f32.mrf.mxu0
        %v1493 = vadd.f32 0.0, %v1492
        %v1494 = vpop.f32.mrf.mxu0
        %v1495 = vadd.f32 0.0, %v1494
        %1496 = vmatmul.bf16.gmra.mxu0 %v1471
        %v1497 = vpop.f32.mrf.mxu0
        %v1498 = vadd.f32 0.0, %v1497
        %v1499 = vpop.f32.mrf.mxu0
        %v1500 = vadd.f32 0.0, %v1499
        %1501 = vdwg.mxu0
        %v1502 = vadd.f32 %v1397, %v1483
        %v1503 = vadd.f32 %v1399, %v1485
        %v1504 = vadd.f32 %v1402, %v1488
        %v1505 = vadd.f32 %v1404, %v1490
        %v1506 = vadd.f32 %v1407, %v1493
        %v1507 = vadd.f32 %v1409, %v1495
        %v1508 = vadd.f32 %v1412, %v1498
        %v1509 = vadd.f32 %v1414, %v1500
        %v1510 = vmul.f32 %v1276, %v401
        %v1511 = vmul.f32 %v1275, %v402
        %v1512 = vmul.f32 %v1274, %v403
        %v1513 = vmul.f32 %v1273, %v404
        %v1514 = vmul.f32 %v1272, %v405
        %v1515 = vmul.f32 %v1271, %v406
        %v1516 = vmul.f32 %v1270, %v407
        %v1517 = vmul.f32 %v1269, %v408
        %v1518 = vpack.c.bf16 %v1511, %v1510
        %v1519 = vpack.c.bf16 %v1513, %v1512
        %v1520 = vpack.c.bf16 %v1515, %v1514
        %v1521 = vpack.c.bf16 %v1517, %v1516
        %s1522 = scalar_lea.vmem [#allocation5], 48
        %v1523 = vld [vmem:[%s1522] sm:$0xf]
        %v1524 = vld [vmem:[%s1522 + $0x4] sm:$0xf]
        %v1525 = vld [vmem:[%s1522 + $0x8] sm:$0xf]
        %v1526 = vld [vmem:[%s1522 + $0xc] sm:$0xf]
        %v1531 = vunpack.c.l.b16 %v1523
        %v1532 = vunpack.c.l.b16 %v1524
        %v1533 = vunpack.c.l.b16 %v1525
        %v1534 = vunpack.c.l.b16 %v1526
        %v1535 = vpack.c.b16 %v1532, %v1531
        %v1536 = vpack.c.b16 %v1534, %v1533
        %v1540 = vsel %vm575, %v1518, 0
        %v1543 = vsel %vm575, %v1519, 0
        %v1546 = vsel %vm575, %v1520, 0
        %v1549 = vsel %vm575, %v1521, 0
        %1551 = vmatpush.bf16.msra.mxu0 0
        %1552 = vmatpush.bf16.msra.mxu0 0
        %1553 = vmatpush.bf16.msra.mxu0 0
        %1554 = vmatpush.bf16.msra.mxu0 0
        %1555 = vmatpush.bf16.msra.mxu0 0
        %1556 = vmatpush.bf16.msra.mxu0 0
        %1557 = vmatpush.bf16.msra.mxu0 %v1536
        %1558 = vmatpush.bf16.msra.mxu0 %v1535
        %1559 = vmatmul.bf16.gmra.mxu0 %v1540
        %v1560 = vpop.f32.mrf.mxu0
        %v1561 = vadd.f32 0.0, %v1560
        %v1562 = vpop.f32.mrf.mxu0
        %v1563 = vadd.f32 0.0, %v1562
        %1564 = vmatmul.bf16.gmra.mxu0 %v1543
        %v1565 = vpop.f32.mrf.mxu0
        %v1566 = vadd.f32 0.0, %v1565
        %v1567 = vpop.f32.mrf.mxu0
        %v1568 = vadd.f32 0.0, %v1567
        %1569 = vmatmul.bf16.gmra.mxu0 %v1546
        %v1570 = vpop.f32.mrf.mxu0
        %v1571 = vadd.f32 0.0, %v1570
        %v1572 = vpop.f32.mrf.mxu0
        %v1573 = vadd.f32 0.0, %v1572
        %1574 = vmatmul.bf16.gmra.mxu0 %v1549
        %v1575 = vpop.f32.mrf.mxu0
        %v1576 = vadd.f32 0.0, %v1575
        %v1577 = vpop.f32.mrf.mxu0
        %v1578 = vadd.f32 0.0, %v1577
        %1579 = vdwg.mxu0
        %v1580 = vadd.f32 %v1502, %v1561
        %v1581 = vadd.f32 %v1503, %v1563
        %v1582 = vadd.f32 %v1504, %v1566
        %v1583 = vadd.f32 %v1505, %v1568
        %v1584 = vadd.f32 %v1506, %v1571
        %v1585 = vadd.f32 %v1507, %v1573
        %v1586 = vadd.f32 %v1508, %v1576
        %v1587 = vadd.f32 %v1509, %v1578
        %v1588 = vpack.c.bf16 %v1254, %v1253
        %v1589 = vpack.c.bf16 %v1256, %v1255
        %v1590 = vpack.c.bf16 %v1258, %v1257
        %v1591 = vpack.c.bf16 %v1260, %v1259
        %s1592 = scalar_lea.vmem [#allocation5], 64
        %v1593 = vld [vmem:[%s1592] sm:$0xf]
        %v1594 = vld [vmem:[%s1592 + $0x4] sm:$0xf]
        %v1595 = vld [vmem:[%s1592 + $0x8] sm:$0xf]
        %v1596 = vld [vmem:[%s1592 + $0xc] sm:$0xf]
        %v1601 = vunpack.c.l.b16 %v1593
        %v1602 = vunpack.c.l.b16 %v1594
        %v1603 = vunpack.c.l.b16 %v1595
        %v1604 = vunpack.c.l.b16 %v1596
        %v1605 = vpack.c.b16 %v1602, %v1601
        %v1606 = vpack.c.b16 %v1604, %v1603
        %v1610 = vsel %vm575, %v1588, 0
        %v1613 = vsel %vm575, %v1589, 0
        %v1616 = vsel %vm575, %v1590, 0
        %v1619 = vsel %vm575, %v1591, 0
        %1621 = vmatpush.bf16.msra.mxu0 0
        %1622 = vmatpush.bf16.msra.mxu0 0
        %1623 = vmatpush.bf16.msra.mxu0 0
        %1624 = vmatpush.bf16.msra.mxu0 0
        %1625 = vmatpush.bf16.msra.mxu0 0
        %1626 = vmatpush.bf16.msra.mxu0 0
        %1627 = vmatpush.bf16.msra.mxu0 %v1606
        %1628 = vmatpush.bf16.msra.mxu0 %v1605
        %1629 = vmatmul.bf16.gmra.mxu0 %v1610
        %v1630 = vpop.f32.mrf.mxu0
        %v1631 = vadd.f32 0.0, %v1630
        %v1632 = vpop.f32.mrf.mxu0
        %v1633 = vadd.f32 0.0, %v1632
        %1634 = vmatmul.bf16.gmra.mxu0 %v1613
        %v1635 = vpop.f32.mrf.mxu0
        %v1636 = vadd.f32 0.0, %v1635
        %v1637 = vpop.f32.mrf.mxu0
        %v1638 = vadd.f32 0.0, %v1637
        %1639 = vmatmul.bf16.gmra.mxu0 %v1616
        %v1640 = vpop.f32.mrf.mxu0
        %v1641 = vadd.f32 0.0, %v1640
        %v1642 = vpop.f32.mrf.mxu0
        %v1643 = vadd.f32 0.0, %v1642
        %1644 = vmatmul.bf16.gmra.mxu0 %v1619
        %v1645 = vpop.f32.mrf.mxu0
        %v1646 = vadd.f32 0.0, %v1645
        %v1647 = vpop.f32.mrf.mxu0
        %v1648 = vadd.f32 0.0, %v1647
        %1649 = vdwg.mxu0
        %v1650 = vadd.f32 %v1580, %v1631
        %v1651 = vadd.f32 %v1581, %v1633
        %v1652 = vadd.f32 %v1582, %v1636
        %v1653 = vadd.f32 %v1583, %v1638
        %v1654 = vadd.f32 %v1584, %v1641
        %v1655 = vadd.f32 %v1585, %v1643
        %v1656 = vadd.f32 %v1586, %v1646
        %v1657 = vadd.f32 %v1587, %v1648
        %v1658 = vmul.f32 %v1430, %v417
        %v1659 = vmul.f32 %v1429, %v418
        %v1660 = vmul.f32 %v1428, %v419
        %v1661 = vmul.f32 %v1427, %v420
        %v1662 = vmul.f32 %v1426, %v421
        %v1663 = vmul.f32 %v1425, %v422
        %v1664 = vmul.f32 %v1424, %v423
        %v1665 = vmul.f32 %v1431, %v424
        %v1666 = vpack.c.bf16 %v1659, %v1658
        %v1667 = vpack.c.bf16 %v1661, %v1660
        %v1668 = vpack.c.bf16 %v1663, %v1662
        %v1669 = vpack.c.bf16 %v1665, %v1664
        %s1670 = scalar_lea.vmem [#allocation5], 80
        %v1671 = vld [vmem:[%s1670] sm:$0xf]
        %v1672 = vld [vmem:[%s1670 + $0x4] sm:$0xf]
        %v1673 = vld [vmem:[%s1670 + $0x8] sm:$0xf]
        %v1674 = vld [vmem:[%s1670 + $0xc] sm:$0xf]
        %v1679 = vunpack.c.l.b16 %v1671
        %v1680 = vunpack.c.l.b16 %v1672
        %v1681 = vunpack.c.l.b16 %v1673
        %v1682 = vunpack.c.l.b16 %v1674
        %v1683 = vpack.c.b16 %v1680, %v1679
        %v1684 = vpack.c.b16 %v1682, %v1681
        %v1688 = vsel %vm575, %v1666, 0
        %v1691 = vsel %vm575, %v1667, 0
        %v1694 = vsel %vm575, %v1668, 0
        %v1697 = vsel %vm575, %v1669, 0
        %1699 = vmatpush.bf16.msra.mxu0 0
        %1700 = vmatpush.bf16.msra.mxu0 0
        %1701 = vmatpush.bf16.msra.mxu0 0
        %1702 = vmatpush.bf16.msra.mxu0 0
        %1703 = vmatpush.bf16.msra.mxu0 0
        %1704 = vmatpush.bf16.msra.mxu0 0
        %1705 = vmatpush.bf16.msra.mxu0 %v1684
        %1706 = vmatpush.bf16.msra.mxu0 %v1683
        %1707 = vmatmul.bf16.gmra.mxu0 %v1688
        %v1708 = vpop.f32.mrf.mxu0
        %v1709 = vadd.f32 0.0, %v1708
        %v1710 = vpop.f32.mrf.mxu0
        %v1711 = vadd.f32 0.0, %v1710
        %1712 = vmatmul.bf16.gmra.mxu0 %v1691
        %v1713 = vpop.f32.mrf.mxu0
        %v1714 = vadd.f32 0.0, %v1713
        %v1715 = vpop.f32.mrf.mxu0
        %v1716 = vadd.f32 0.0, %v1715
        %1717 = vmatmul.bf16.gmra.mxu0 %v1694
        %v1718 = vpop.f32.mrf.mxu0
        %v1719 = vadd.f32 0.0, %v1718
        %v1720 = vpop.f32.mrf.mxu0
        %v1721 = vadd.f32 0.0, %v1720
        %1722 = vmatmul.bf16.gmra.mxu0 %v1697
        %v1723 = vpop.f32.mrf.mxu0
        %v1724 = vadd.f32 0.0, %v1723
        %v1725 = vpop.f32.mrf.mxu0
        %v1726 = vadd.f32 0.0, %v1725
        %1727 = vdwg.mxu0
        %v1728 = vadd.f32 %v1650, %v1709
        %v1729 = vadd.f32 %v1651, %v1711
        %v1730 = vadd.f32 %v1652, %v1714
        %v1731 = vadd.f32 %v1653, %v1716
        %v1732 = vadd.f32 %v1654, %v1719
        %v1733 = vadd.f32 %v1655, %v1721
        %v1734 = vadd.f32 %v1656, %v1724
        %v1735 = vadd.f32 %v1657, %v1726
        %v1736 = vmul.f32 %v1275, %v449
        %v1737 = vmul.f32 %v1274, %v450
        %v1738 = vmul.f32 %v1273, %v451
        %v1739 = vmul.f32 %v1272, %v452
        %v1740 = vmul.f32 %v1271, %v453
        %v1741 = vmul.f32 %v1270, %v454
        %v1742 = vmul.f32 %v1269, %v455
        %v1743 = vmul.f32 %v1276, %v456
        %v1744 = vpack.c.bf16 %v1737, %v1736
        %v1745 = vpack.c.bf16 %v1739, %v1738
        %v1746 = vpack.c.bf16 %v1741, %v1740
        %v1747 = vpack.c.bf16 %v1743, %v1742
        %s1748 = scalar_lea.vmem [#allocation5], 96
        %v1749 = vld [vmem:[%s1748] sm:$0xf]
        %v1750 = vld [vmem:[%s1748 + $0x4] sm:$0xf]
        %v1751 = vld [vmem:[%s1748 + $0x8] sm:$0xf]
        %v1752 = vld [vmem:[%s1748 + $0xc] sm:$0xf]
        %v1757 = vunpack.c.l.b16 %v1749
        %v1758 = vunpack.c.l.b16 %v1750
        %v1759 = vunpack.c.l.b16 %v1751
        %v1760 = vunpack.c.l.b16 %v1752
        %v1761 = vpack.c.b16 %v1758, %v1757
        %v1762 = vpack.c.b16 %v1760, %v1759
        %v1766 = vsel %vm575, %v1744, 0
        %v1769 = vsel %vm575, %v1745, 0
        %v1772 = vsel %vm575, %v1746, 0
        %v1775 = vsel %vm575, %v1747, 0
        %1777 = vmatpush.bf16.msra.mxu0 0
        %1778 = vmatpush.bf16.msra.mxu0 0
        %1779 = vmatpush.bf16.msra.mxu0 0
        %1780 = vmatpush.bf16.msra.mxu0 0
        %1781 = vmatpush.bf16.msra.mxu0 0
        %1782 = vmatpush.bf16.msra.mxu0 0
        %1783 = vmatpush.bf16.msra.mxu0 %v1762
        %1784 = vmatpush.bf16.msra.mxu0 %v1761
        %1785 = vmatmul.bf16.gmra.mxu0 %v1766
        %v1786 = vpop.f32.mrf.mxu0
        %v1787 = vadd.f32 0.0, %v1786
        %v1788 = vpop.f32.mrf.mxu0
        %v1789 = vadd.f32 0.0, %v1788
        %1790 = vmatmul.bf16.gmra.mxu0 %v1769
        %v1791 = vpop.f32.mrf.mxu0
        %v1792 = vadd.f32 0.0, %v1791
        %v1793 = vpop.f32.mrf.mxu0
        %v1794 = vadd.f32 0.0, %v1793
        %1795 = vmatmul.bf16.gmra.mxu0 %v1772
        %v1796 = vpop.f32.mrf.mxu0
        %v1797 = vadd.f32 0.0, %v1796
        %v1798 = vpop.f32.mrf.mxu0
        %v1799 = vadd.f32 0.0, %v1798
        %1800 = vmatmul.bf16.gmra.mxu0 %v1775
        %v1801 = vpop.f32.mrf.mxu0
        %v1802 = vadd.f32 0.0, %v1801
        %v1803 = vpop.f32.mrf.mxu0
        %v1804 = vadd.f32 0.0, %v1803
        %1805 = vdwg.mxu0
        %v1806 = vadd.f32 %v1728, %v1787
        %v1807 = vadd.f32 %v1729, %v1789
        %v1808 = vadd.f32 %v1730, %v1792
        %v1809 = vadd.f32 %v1731, %v1794
        %v1810 = vadd.f32 %v1732, %v1797
        %v1811 = vadd.f32 %v1733, %v1799
        %v1812 = vadd.f32 %v1734, %v1802
        %v1813 = vadd.f32 %v1735, %v1804
        %v1814 = vmul.f32 %v1254, %v465
        %v1815 = vmul.f32 %v1255, %v466
        %v1816 = vmul.f32 %v1256, %v467
        %v1817 = vmul.f32 %v1257, %v468
        %v1818 = vmul.f32 %v1258, %v469
        %v1819 = vmul.f32 %v1259, %v470
        %v1820 = vmul.f32 %v1260, %v471
        %v1821 = vmul.f32 %v1253, %v472
        %v1822 = vpack.c.bf16 %v1815, %v1814
        %v1823 = vpack.c.bf16 %v1817, %v1816
        %v1824 = vpack.c.bf16 %v1819, %v1818
        %v1825 = vpack.c.bf16 %v1821, %v1820
        %s1826 = scalar_lea.vmem [#allocation5], 112
        %v1827 = vld [vmem:[%s1826] sm:$0xf]
        %v1828 = vld [vmem:[%s1826 + $0x4] sm:$0xf]
        %v1829 = vld [vmem:[%s1826 + $0x8] sm:$0xf]
        %v1830 = vld [vmem:[%s1826 + $0xc] sm:$0xf]
        %v1835 = vunpack.c.l.b16 %v1827
        %v1836 = vunpack.c.l.b16 %v1828
        %v1837 = vunpack.c.l.b16 %v1829
        %v1838 = vunpack.c.l.b16 %v1830
        %v1839 = vpack.c.b16 %v1836, %v1835
        %v1840 = vpack.c.b16 %v1838, %v1837
        %v1844 = vsel %vm575, %v1822, 0
        %v1847 = vsel %vm575, %v1823, 0
        %v1850 = vsel %vm575, %v1824, 0
        %v1853 = vsel %vm575, %v1825, 0
        %1855 = vmatpush.bf16.msra.mxu0 0
        %1856 = vmatpush.bf16.msra.mxu0 0
        %1857 = vmatpush.bf16.msra.mxu0 0
        %1858 = vmatpush.bf16.msra.mxu0 0
        %1859 = vmatpush.bf16.msra.mxu0 0
        %1860 = vmatpush.bf16.msra.mxu0 0
        %1861 = vmatpush.bf16.msra.mxu0 %v1840
        %1862 = vmatpush.bf16.msra.mxu0 %v1839
        %1863 = vmatmul.bf16.gmra.mxu0 %v1844
        %v1864 = vpop.f32.mrf.mxu0
        %v1865 = vadd.f32 0.0, %v1864
        %v1866 = vpop.f32.mrf.mxu0
        %v1867 = vadd.f32 0.0, %v1866
        %1868 = vmatmul.bf16.gmra.mxu0 %v1847
        %v1869 = vpop.f32.mrf.mxu0
        %v1870 = vadd.f32 0.0, %v1869
        %v1871 = vpop.f32.mrf.mxu0
        %v1872 = vadd.f32 0.0, %v1871
        %1873 = vmatmul.bf16.gmra.mxu0 %v1850
        %v1874 = vpop.f32.mrf.mxu0
        %v1875 = vadd.f32 0.0, %v1874
        %v1876 = vpop.f32.mrf.mxu0
        %v1877 = vadd.f32 0.0, %v1876
        %1878 = vmatmul.bf16.gmra.mxu0 %v1853
        %v1879 = vpop.f32.mrf.mxu0
        %v1880 = vadd.f32 0.0, %v1879
        %v1881 = vpop.f32.mrf.mxu0
        %v1882 = vadd.f32 0.0, %v1881
        %1883 = vdwg.mxu0
        %v1884 = vadd.f32 %v1806, %v1865
        %v1885 = vadd.f32 %v1807, %v1867
        %v1886 = vadd.f32 %v1808, %v1870
        %v1887 = vadd.f32 %v1809, %v1872
        %v1888 = vadd.f32 %v1810, %v1875
        %v1889 = vadd.f32 %v1811, %v1877
        %v1890 = vadd.f32 %v1812, %v1880
        %v1891 = vadd.f32 %v1813, %v1882
        %v1892 = vmul.f32 %v1429, %v489
        %v1893 = vmul.f32 %v1428, %v490
        %v1894 = vmul.f32 %v1427, %v491
        %v1895 = vmul.f32 %v1426, %v492
        %v1896 = vmul.f32 %v1425, %v493
        %v1897 = vmul.f32 %v1424, %v494
        %v1898 = vmul.f32 %v1431, %v495
        %v1899 = vmul.f32 %v1430, %v496
        %v1900 = vpack.c.bf16 %v1893, %v1892
        %v1901 = vpack.c.bf16 %v1895, %v1894
        %v1902 = vpack.c.bf16 %v1897, %v1896
        %v1903 = vpack.c.bf16 %v1899, %v1898
        %s1904 = scalar_lea.vmem [#allocation5], 128
        %v1905 = vld [vmem:[%s1904] sm:$0xf]
        %v1906 = vld [vmem:[%s1904 + $0x4] sm:$0xf]
        %v1907 = vld [vmem:[%s1904 + $0x8] sm:$0xf]
        %v1908 = vld [vmem:[%s1904 + $0xc] sm:$0xf]
        %v1913 = vunpack.c.l.b16 %v1905
        %v1914 = vunpack.c.l.b16 %v1906
        %v1915 = vunpack.c.l.b16 %v1907
        %v1916 = vunpack.c.l.b16 %v1908
        %v1917 = vpack.c.b16 %v1914, %v1913
        %v1918 = vpack.c.b16 %v1916, %v1915
        %v1922 = vsel %vm575, %v1900, 0
        %v1925 = vsel %vm575, %v1901, 0
        %v1928 = vsel %vm575, %v1902, 0
        %v1931 = vsel %vm575, %v1903, 0
        %1933 = vmatpush.bf16.msra.mxu0 0
        %1934 = vmatpush.bf16.msra.mxu0 0
        %1935 = vmatpush.bf16.msra.mxu0 0
        %1936 = vmatpush.bf16.msra.mxu0 0
        %1937 = vmatpush.bf16.msra.mxu0 0
        %1938 = vmatpush.bf16.msra.mxu0 0
        %1939 = vmatpush.bf16.msra.mxu0 %v1918
        %1940 = vmatpush.bf16.msra.mxu0 %v1917
        %1941 = vmatmul.bf16.gmra.mxu0 %v1922
        %v1942 = vpop.f32.mrf.mxu0
        %v1943 = vadd.f32 0.0, %v1942
        %v1944 = vpop.f32.mrf.mxu0
        %v1945 = vadd.f32 0.0, %v1944
        %1946 = vmatmul.bf16.gmra.mxu0 %v1925
        %v1947 = vpop.f32.mrf.mxu0
        %v1948 = vadd.f32 0.0, %v1947
        %v1949 = vpop.f32.mrf.mxu0
        %v1950 = vadd.f32 0.0, %v1949
        %1951 = vmatmul.bf16.gmra.mxu0 %v1928
        %v1952 = vpop.f32.mrf.mxu0
        %v1953 = vadd.f32 0.0, %v1952
        %v1954 = vpop.f32.mrf.mxu0
        %v1955 = vadd.f32 0.0, %v1954
        %1956 = vmatmul.bf16.gmra.mxu0 %v1931
        %v1957 = vpop.f32.mrf.mxu0
        %v1958 = vadd.f32 0.0, %v1957
        %v1959 = vpop.f32.mrf.mxu0
        %v1960 = vadd.f32 0.0, %v1959
        %1961 = vdwg.mxu0
        %v1962 = vadd.f32 %v1884, %v1943
        %v1963 = vadd.f32 %v1885, %v1945
        %v1964 = vadd.f32 %v1886, %v1948
        %v1965 = vadd.f32 %v1887, %v1950
        %v1966 = vadd.f32 %v1888, %v1953
        %v1967 = vadd.f32 %v1889, %v1955
        %v1968 = vadd.f32 %v1890, %v1958
        %v1969 = vadd.f32 %v1891, %v1960
        %v1970 = vld [vmem:[%s4] sm:$0x1]
        %v1972 = vperm.slane %v1970, 0
        %v1974 = vadd.f32 %v1962, %v1972
        %v1975 = vadd.f32 %v1963, %v1972
        %v1976 = vadd.f32 %v1964, %v1972
        %v1977 = vadd.f32 %v1965, %v1972
        %v1978 = vadd.f32 %v1966, %v1972
        %v1979 = vadd.f32 %v1967, %v1972
        %v1980 = vadd.f32 %v1968, %v1972
        %v1981 = vadd.f32 %v1969, %v1972
        %v1982 = vld [vmem:[%s5] sm:$0x1]
        %v1983 = vtanh.pop %v1974
        %v1984 = vtanh.pop %v1975
        %v1985 = vtanh.pop %v1976
        %v1986 = vtanh.pop %v1977
        %v1987 = vtanh.pop %v1978
        %v1988 = vtanh.pop %v1979
        %v1989 = vtanh.pop %v1980
        %v1990 = vtanh.pop %v1981
        %v1991 = vsub.f32 %v1983, %v1974
        %v1992 = vsub.f32 %v1984, %v1975
        %v1993 = vsub.f32 %v1985, %v1976
        %v1994 = vsub.f32 %v1986, %v1977
        %v1995 = vsub.f32 %v1987, %v1978
        %v1996 = vsub.f32 %v1988, %v1979
        %v1997 = vsub.f32 %v1989, %v1980
        %v1998 = vsub.f32 %v1990, %v1981
        %v2000 = vperm.slane %v1982, 0
        %v2002 = vmul.f32 %v2000, %v1991
        %v2003 = vmul.f32 %v2000, %v1992
        %v2004 = vmul.f32 %v2000, %v1993
        %v2005 = vmul.f32 %v2000, %v1994
        %v2006 = vmul.f32 %v2000, %v1995
        %v2007 = vmul.f32 %v2000, %v1996
        %v2008 = vmul.f32 %v2000, %v1997
        %v2009 = vmul.f32 %v2000, %v1998
        %v2010 = vadd.f32 %v1974, %v2002
        %v2011 = vadd.f32 %v1975, %v2003
        %v2012 = vadd.f32 %v1976, %v2004
        %v2013 = vadd.f32 %v1977, %v2005
        %v2014 = vadd.f32 %v1978, %v2006
        %v2015 = vadd.f32 %v1979, %v2007
        %v2016 = vadd.f32 %v1980, %v2008
        %v2017 = vadd.f32 %v1981, %v2009
        %2018 = vst [vmem:[%s279] sm:$0xff] %v2010
        %2019 = vst [vmem:[%s279 + $0x8] sm:$0xff] %v2011
        %2020 = vst [vmem:[%s279 + $0x10] sm:$0xff] %v2012
        %2021 = vst [vmem:[%s279 + $0x18] sm:$0xff] %v2013
        %2022 = vst [vmem:[%s279 + $0x20] sm:$0xff] %v2014
        %2023 = vst [vmem:[%s279 + $0x28] sm:$0xff] %v2015
        %2024 = vst [vmem:[%s279 + $0x30] sm:$0xff] %v2016
        %2025 = vst [vmem:[%s279 + $0x38] sm:$0xff] %v2017
        %s2026 = sand.u32 %s161, 1
        %s2027 = scalar_lea.sflag [#allocation4], %s2026
        %s2028 = sand.u32 %s161, 1
        %s2029 = smul.addr %s2028, 64
        %s2030 = scalar_lea.vmem [#allocation7], %s2029
        // Predicated region
        $region53: #{tpu_custom_call.1} parent=43 // pred_check
          %p2031 = pneg %p171
        $region54: #{tpu_custom_call.1} parent=43 // pred_check_branch
          %2033 = sbr.rel (%p2031) target = $region56
        $region55: #{tpu_custom_call.1} parent=43 // pred_region
          %s2034 = smul.u32 8, %s22
          %2036 = vsyncadd %s2027, 0
          %s2037 = smul.addr %s2034, 8
          %s2038 = scalar_lea.hbm %s6, %s2037
          %s2039 = sshll.u32 %s2030, 4
          %s2040 = int_to_ptr.vmem [resolvable:$true] %s2039
          %s2041 = sshll.u32 %s2038, 4
          %s2042 = int_to_ptr.hbm [resolvable:$true] %s2041
          %2047 = dma.vmem_to_hbm [thread:$0]  %s2040, 1024, %s2042, %s2027, 128, 128, 8
        $region56: #{tpu_custom_call.1} parent=43 // pred_fallthru
          _
      $region44: #{tpu_custom_call.1} parent=5 // pred_fallthru
        _
      %p2048 = scmp.le.s32.totalorder 2, %s17
      // Predicated region
      $region57: #{tpu_custom_call.1} parent=5 // pred_check
        %p2049 = pneg %p2048
      $region58: #{tpu_custom_call.1} parent=5 // pred_check_branch
        %2051 = sbr.rel (%p2049) target = $region60
      $region59: #{tpu_custom_call.1} parent=5 // pred_region
        %s2052 = ssub.s32 %s17, 2
        // Predicated region
        $region61: #{tpu_custom_call.1} parent=59 // pred_check
          %p2053 = pneg %p177
        $region62: #{tpu_custom_call.1} parent=59 // pred_check_branch
          %2055 = sbr.rel (%p2053) target = $region64
        $region63: #{tpu_custom_call.1} parent=59 // pred_region
          %s2056 = sand.u32 %s162, 1
          %s2057 = scalar_lea.sflag [#allocation4], %s2056
          %s2058 = sand.u32 %s162, 1
          %s2059 = smul.addr %s2058, 64
          %s2060 = scalar_lea.vmem [#allocation7], %s2059
          %2062 = dma.done %s2057, 1024
        $region64: #{tpu_custom_call.1} parent=59 // pred_fallthru
          _
      $region60: #{tpu_custom_call.1} parent=5 // pred_fallthru
        _
    $region6: #{tpu_custom_call.1} parent=1 // loop_footer
      %s21 = sadd.s32 1, %s17
    $region7: #{tpu_custom_call.1} parent=1 // loop_footer_branch
      %16 = sbr.rel target = $region3
    $region8: #{tpu_custom_call.1} parent=1 // loop_exit
      _
    %2063 = vsyncpa [#allocation3], 1
    %s2064 = scalar_lea.sflag [#allocation3], 1
    %2065 = vsyncpa %s2064, 1
    %2066 = vsyncpa [#allocation6], 1
    %2067 = vsyncpa [#allocation4], 1
    %s2068 = scalar_lea.sflag [#allocation4], 1
    %2069 = vsyncpa %s2068, 1

</llo_original>
